<compile_context>
chip_gen: v7x
topology: tpu7x:2x2x1
jax: 0.10.0
libtpu: 0.0.40
codegen_flags: <defaults>
</compile_context>

<pallas_src>
import math

import jax
import jax.numpy as jnp
from jax import lax
from jax.experimental import pallas as pl
from jax.experimental.pallas import tpu as pltpu

_LANE = 128
_SUBLANE = 8


def _round_up(v, m):
    return ((v + m - 1) // m) * m


# ------------------------------------------------------------------ kernel --
def make_mapping_kernel(num_layers, inv_true_feat, eps=1e-8, neg_slope=0.2):
    """PixelNorm + num_layers x (Linear + LeakyReLU) on one batch tile.

    Weights arrive pre-transposed to (in_pad, out_pad) with the equalized-LR
    scale folded in (optionally bf16); biases as (1, out_pad) f32.  Padded
    feature columns are zero, so sum(x^2) over the padded lane axis is exact
    and padded output columns of every layer stay zero.
    """

    def kernel(*refs):
        x_ref = refs[0]
        wb_refs = refs[1:1 + 2 * num_layers]
        out_ref = refs[1 + 2 * num_layers]

        x = x_ref[...].astype(jnp.float32)

        # PixelNorm over the true feature count (padded lanes contribute 0).
        ss = jnp.sum(x * x, axis=1, keepdims=True)
        x = x * lax.rsqrt(ss * inv_true_feat + eps)

        for i in range(num_layers):
            w = wb_refs[2 * i][...]        # (in_pad, out_pad), scale folded in
            b = wb_refs[2 * i + 1][...]    # (1, out_pad), f32
            # Cast only at the MXU input; accumulate f32; elementwise in f32.
            x = jnp.dot(x.astype(w.dtype), w,
                        preferred_element_type=jnp.float32) + b
            x = jnp.where(x > 0, x, neg_slope * x)

        out_ref[...] = x.astype(out_ref.dtype)

    return kernel


# -------------------------------------------------- one-time parameter prep --
def prepare_mapping_params(emb_weight, linear_weights, linear_biases, *,
                           num_embeddings, in_features,
                           weights_dtype=jnp.float32):
    """Fold equalized-LR scales, transpose to (in,out), zero-pad to lane
    multiples, optional bf16 cast, pre-scale the embedding table.

    Call once at parameter load/update time, NOT per forward call.
    """
    feat_pad = _round_up(in_features, _LANE)
    ws_p, bs_p = [], []
    prev_pad = feat_pad
    for w, b in zip(linear_weights, linear_biases):
        fout, fin = w.shape
        scale = math.sqrt(2.0 / fin)                    # variance_scale = 2
        wt = w.astype(jnp.float32).T * scale            # (in, out)
        fout_pad = _round_up(fout, _LANE)
        wp = jnp.zeros((prev_pad, fout_pad), jnp.float32).at[:fin, :fout].set(wt)
        bp = jnp.zeros((1, fout_pad), jnp.float32).at[:, :fout].set(
            b.reshape(1, fout).astype(jnp.float32))
        ws_p.append(wp.astype(weights_dtype))
        bs_p.append(bp)                                  # bias stays f32
        prev_pad = fout_pad

    emb_scaled = None
    if emb_weight is not None:
        emb_scaled = (emb_weight.astype(jnp.float32)
                      * math.sqrt(1.0 / num_embeddings))  # variance_scale = 1

    return dict(
        emb_weight=emb_scaled,
        weights=ws_p,
        biases=bs_p,
        in_features=in_features,
        feat_pad=feat_pad,
        out_pad=prev_pad,
        out_dim=linear_weights[-1].shape[0],
        num_layers=len(linear_weights),
    )


# -------------------------------------------------------------- tile picker --
def _pick_tile_b(batch, weight_bytes, feat_pad, out_pad, max_dim_pad,
                 vmem_target_bytes):
    # Per batch-row VMEM: double-buffered in/out tiles + ~3 live f32
    # intermediates of the widest layer.
    per_row = 4 * (2 * feat_pad + 2 * out_pad + 3 * max_dim_pad)
    budget = max(vmem_target_bytes - weight_bytes, per_row * _SUBLANE)
    tile_cap = max(_SUBLANE, (budget // per_row) // _SUBLANE * _SUBLANE)
    tile_cap = min(tile_cap, 512)
    # >= 2 grid steps when possible so both v7x TensorCores get work.
    if batch > _SUBLANE:
        tile_cap = min(tile_cap, _round_up((batch + 1) // 2, _SUBLANE))
    # Largest multiple of 8 <= tile_cap whose batch-pad waste is <= 12.5%.
    best = _SUBLANE
    t = _SUBLANE
    while t <= tile_cap:
        waste = _round_up(batch, t) - batch
        if waste * 8 <= batch or t == _SUBLANE:
            best = t
        t += _SUBLANE
    return best


# --------------------------------------------------------------- apply path --
def mapping_network_apply(latents, labels, params, *, tile_b=None):
    """Forward pass using pre-prepared params (see prepare_mapping_params)."""
    B = latents.shape[0]
    num_layers = params["num_layers"]
    feat_pad = params["feat_pad"]
    out_pad = params["out_pad"]
    out_dim = params["out_dim"]
    true_feat = params["in_features"]
    ws_p = params["weights"]
    bs_p = params["biases"]

    # Embedding gather + concat in the wrapper (layout plumbing, not compute).
    if labels is not None:
        emb = params["emb_weight"][labels]
        x = jnp.concatenate([latents.astype(jnp.float32), emb], axis=1)
    else:
        x = latents.astype(jnp.float32)
    assert x.shape[1] == true_feat, "layer-0 in_features mismatch"

    weight_bytes = sum(int(w.size) * w.dtype.itemsize for w in ws_p)
    weight_bytes += sum(int(b.size) * b.dtype.itemsize for b in bs_p)
    max_dim_pad = max([feat_pad] + [w.shape[1] for w in ws_p])

    if tile_b is None:
        tile_b = _pick_tile_b(B, weight_bytes, feat_pad, out_pad, max_dim_pad,
                              vmem_target_bytes=40 << 20)
    tile_b = _round_up(tile_b, _SUBLANE)
    b_pad = _round_up(B, tile_b)

    # Skip the pad copy when already aligned (the common StyleGAN case).
    if b_pad == B and feat_pad == true_feat:
        x_p = x
    else:
        x_p = jnp.zeros((b_pad, feat_pad), jnp.float32).at[:B, :true_feat].set(x)

    grid = (b_pad // tile_b,)
    kernel = make_mapping_kernel(num_layers, 1.0 / float(true_feat))

    flat_wb = []
    for wp, bp in zip(ws_p, bs_p):
        flat_wb.extend([wp, bp])

    def build_in_specs(single_buffer_weights):
        specs = [pl.BlockSpec((tile_b, feat_pad), lambda i: (i, 0))]
        for wp, bp in zip(ws_p, bs_p):
            if single_buffer_weights:
                specs.append(pl.BlockSpec(wp.shape, lambda i: (0, 0),
                                          pipeline_mode=pl.Buffered(1)))
                specs.append(pl.BlockSpec(bp.shape, lambda i: (0, 0),
                                          pipeline_mode=pl.Buffered(1)))
            else:
                specs.append(pl.BlockSpec(wp.shape, lambda i: (0, 0)))
                specs.append(pl.BlockSpec(bp.shape, lambda i: (0, 0)))
        return specs

    out_spec = pl.BlockSpec((tile_b, out_pad), lambda i: (i, 0))

    # Explicit VMEM budget: weights (x2 for the double-buffered fallback) +
    # activation tiles/intermediates, with headroom, clamped to [16, 48] MiB.
    act_bytes = 4 * tile_b * (2 * feat_pad + 2 * out_pad + 3 * max_dim_pad)
    vmem_limit = int(1.25 * (2 * weight_bytes + act_bytes)) + (4 << 20)
    vmem_limit = min(max(vmem_limit, 16 << 20), 48 << 20)

    flops = 2 * b_pad * sum(w.shape[0] * w.shape[1] for w in ws_p)
    bytes_accessed = int(x_p.size * 4 + weight_bytes + b_pad * out_pad * 4)
    cost = pl.CostEstimate(flops=flops, transcendentals=0,
                           bytes_accessed=bytes_accessed)

    def call(single_buffer_weights):
        return pl.pallas_call(
            kernel,
            out_shape=jax.ShapeDtypeStruct((b_pad, out_pad), jnp.float32),
            grid_spec=pltpu.PrefetchScalarGridSpec(
                num_scalar_prefetch=0,
                grid=grid,
                in_specs=build_in_specs(single_buffer_weights),
                out_specs=out_spec,
            ),
            compiler_params=pltpu.CompilerParams(
                dimension_semantics=("parallel",),
                vmem_limit_bytes=vmem_limit),
            cost_estimate=cost,
        )(x_p, *flat_wb)

    try:
        out_p = call(single_buffer_weights=True)
    except Exception:
        # Fallback if this build rejects pl.Buffered(1) on a top-level
        # BlockSpec; constant-index weights then stay double-buffered.
        out_p = call(single_buffer_weights=False)

    return out_p[:B, :out_dim]


def mapping_network(latents, labels, emb_weight, linear_weights, linear_biases,
                    *, num_embeddings, tile_b=None, weights_dtype=jnp.float32):
    """Convenience one-shot wrapper (prefer hoisting prepare_mapping_params)."""
    in_features = linear_weights[0].shape[1]
    params = prepare_mapping_params(
        emb_weight, linear_weights, linear_biases,
        num_embeddings=num_embeddings, in_features=in_features,
        weights_dtype=weights_dtype)
    return mapping_network_apply(latents, labels, params, tile_b=tile_b)


# ------------------------------------------------------------------ reference
def mapping_network_reference(latents, labels, emb_weight, linear_weights,
                              linear_biases, *, num_embeddings):
    """Pure-JAX f32 reference for correctness checking."""
    if labels is not None:
        emb_scale = math.sqrt(1.0 / num_embeddings)
        emb = emb_weight[labels] * emb_scale
        x = jnp.concatenate([latents, emb], axis=1)
    else:
        x = latents
    x = x * lax.rsqrt(jnp.mean(x * x, axis=1, keepdims=True) + 1e-8)
    for w, b in zip(linear_weights, linear_biases):
        scale = math.sqrt(2.0 / w.shape[1])
        x = x @ w.T * scale + b.reshape(1, -1)
        x = jnp.where(x > 0, x, 0.2 * x)
    return x


if __name__ == "__main__":
    # Small, deterministic configuration (auto tile_b=8 -> 2 parallel grid steps).
    B = 16
    latent_dim = 16
    num_embeddings = 10
    embedding_dim = 16
    # (in_features, out_features); first layer eats concat(latent, emb) = 32.
    layer_dims = [(32, 32), (32, 32), (32, 32)]

    key = jax.random.PRNGKey(0)
    k_lat, k_lab, k_emb, k_w = jax.random.split(key, 4)

    latents = jax.random.normal(k_lat, (B, latent_dim), dtype=jnp.float32)
    labels = jax.random.randint(k_lab, (B,), 0, num_embeddings, dtype=jnp.int32)

    emb_weight = jax.random.normal(k_emb, (num_embeddings, embedding_dim),
                                   dtype=jnp.float32)
    linear_weights = []
    linear_biases = []
    wkeys = jax.random.split(k_w, 2 * len(layer_dims))
    for li, (fin, fout) in enumerate(layer_dims):
        linear_weights.append(
            jax.random.normal(wkeys[2 * li], (fout, fin), dtype=jnp.float32))
        linear_biases.append(
            0.1 * jax.random.normal(wkeys[2 * li + 1], (fout,),
                                    dtype=jnp.float32))

    ref = mapping_network_reference(latents, labels, emb_weight,
                                    linear_weights, linear_biases,
                                    num_embeddings=num_embeddings)
    ref = jax.block_until_ready(ref)

    # --- f32-weight path (hoisted param prep), strict check -----------------
    params_f32 = prepare_mapping_params(
        emb_weight, linear_weights, linear_biases,
        num_embeddings=num_embeddings, in_features=2 * latent_dim,
        weights_dtype=jnp.float32)
    out = mapping_network_apply(latents, labels, params_f32)
    out = jax.block_until_ready(out)
    if not bool(jnp.allclose(out, ref, atol=1e-4, rtol=1e-4)):
        err = float(jnp.max(jnp.abs(out - ref)))
        raise AssertionError(f"Pallas kernel (f32) mismatch, max abs err={err}")

    # --- bf16-weight path (halves weight DMA/VMEM), loose check -------------
    params_bf16 = prepare_mapping_params(
        emb_weight, linear_weights, linear_biases,
        num_embeddings=num_embeddings, in_features=2 * latent_dim,
        weights_dtype=jnp.bfloat16)
    out_bf16 = mapping_network_apply(latents, labels, params_bf16)
    out_bf16 = jax.block_until_ready(out_bf16)
    err_bf16 = float(jnp.max(jnp.abs(out_bf16 - ref)))
    if not (err_bf16 < 0.25):
        raise AssertionError(f"Pallas kernel (bf16) mismatch, max abs err={err_bf16}")

    print("KERNEL_OK")
</pallas_src>

<mosaic_0001>
module attributes {stable_mosaic.version = 11 : i64} {
  func.func @kernel(%arg0: i32, %arg1: memref<8x128xf32, #tpu.memory_space<vmem>>, %arg2: memref<128x128xf32, #tpu.memory_space<vmem>>, %arg3: memref<1x128xf32, #tpu.memory_space<vmem>>, %arg4: memref<128x128xf32, #tpu.memory_space<vmem>>, %arg5: memref<1x128xf32, #tpu.memory_space<vmem>>, %arg6: memref<128x128xf32, #tpu.memory_space<vmem>>, %arg7: memref<1x128xf32, #tpu.memory_space<vmem>>, %arg8: memref<8x128xf32, #tpu.memory_space<vmem>>) attributes {dimension_semantics = [#tpu.dimension_semantics<parallel>], iteration_bounds = array<i64: 2>, scalar_prefetch = 0 : i64, scratch_operands = 0 : i64, tpu.core_type = #tpu.core_type<tc>, window_params = [{transform_indices = @transform_0, window_bounds = array<i64: 8, 128>}, {pipeline_mode = #tpu.pipeline_mode<synchronous>, transform_indices = @transform_1, window_bounds = array<i64: 128, 128>}, {pipeline_mode = #tpu.pipeline_mode<synchronous>, transform_indices = @transform_2, window_bounds = array<i64: 1, 128>}, {pipeline_mode = #tpu.pipeline_mode<synchronous>, transform_indices = @transform_3, window_bounds = array<i64: 128, 128>}, {pipeline_mode = #tpu.pipeline_mode<synchronous>, transform_indices = @transform_4, window_bounds = array<i64: 1, 128>}, {pipeline_mode = #tpu.pipeline_mode<synchronous>, transform_indices = @transform_5, window_bounds = array<i64: 128, 128>}, {pipeline_mode = #tpu.pipeline_mode<synchronous>, transform_indices = @transform_6, window_bounds = array<i64: 1, 128>}, {transform_indices = @transform_7, window_bounds = array<i64: 8, 128>}]} {
    %c0 = arith.constant 0 : index
    %c0_0 = arith.constant 0 : index
    %0 = vector.load %arg1[%c0, %c0_0] : memref<8x128xf32, #tpu.memory_space<vmem>>, vector<8x128xf32>
    %1 = arith.mulf %0, %0 : vector<8x128xf32>
    %cst = arith.constant dense<0.000000e+00> : vector<8xf32>
    %2 = vector.multi_reduction <add>, %1, %cst [1] : vector<8x128xf32> to vector<8xf32>
    %3 = vector.shape_cast %2 : vector<8xf32> to vector<8x1xf32>
    %cst_1 = arith.constant 3.125000e-02 : f32
    %4 = vector.broadcast %cst_1 : f32 to vector<8x1xf32>
    %5 = arith.mulf %3, %4 : vector<8x1xf32>
    %cst_2 = arith.constant 9.99999993E-9 : f32
    %6 = vector.broadcast %cst_2 : f32 to vector<8x1xf32>
    %7 = arith.addf %5, %6 : vector<8x1xf32>
    %8 = math.rsqrt %7 : vector<8x1xf32>
    %9 = vector.broadcast %8 : vector<8x1xf32> to vector<8x128xf32>
    %10 = arith.mulf %0, %9 : vector<8x128xf32>
    %c0_3 = arith.constant 0 : index
    %c0_4 = arith.constant 0 : index
    %11 = vector.load %arg2[%c0_3, %c0_4] : memref<128x128xf32, #tpu.memory_space<vmem>>, vector<128x128xf32>
    %c0_5 = arith.constant 0 : index
    %c0_6 = arith.constant 0 : index
    %12 = vector.load %arg3[%c0_5, %c0_6] : memref<1x128xf32, #tpu.memory_space<vmem>>, vector<1x128xf32>
    %cst_7 = arith.constant dense<0.000000e+00> : vector<8x128xf32>
    %13 = tpu.matmul %10, %11, %cst_7 {dimension_numbers = #tpu.dot_dimension_numbers<[1], [0], [0], [1], [0, 0, 1, 1], [], []>} : vector<8x128xf32>, vector<128x128xf32>, vector<8x128xf32> -> vector<8x128xf32>
    %14 = vector.broadcast %12 : vector<1x128xf32> to vector<8x128xf32>
    %15 = arith.addf %13, %14 : vector<8x128xf32>
    %cst_8 = arith.constant 0.000000e+00 : f32
    %16 = vector.broadcast %cst_8 : f32 to vector<8x128xf32>
    %17 = arith.cmpf ogt, %15, %16 : vector<8x128xf32>
    %cst_9 = arith.constant 2.000000e-01 : f32
    %18 = vector.broadcast %cst_9 : f32 to vector<8x128xf32>
    %19 = arith.mulf %18, %15 : vector<8x128xf32>
    %20 = arith.select %17, %15, %19 : vector<8x128xi1>, vector<8x128xf32>
    %c0_10 = arith.constant 0 : index
    %c0_11 = arith.constant 0 : index
    %21 = vector.load %arg4[%c0_10, %c0_11] : memref<128x128xf32, #tpu.memory_space<vmem>>, vector<128x128xf32>
    %c0_12 = arith.constant 0 : index
    %c0_13 = arith.constant 0 : index
    %22 = vector.load %arg5[%c0_12, %c0_13] : memref<1x128xf32, #tpu.memory_space<vmem>>, vector<1x128xf32>
    %cst_14 = arith.constant dense<0.000000e+00> : vector<8x128xf32>
    %23 = tpu.matmul %20, %21, %cst_14 {dimension_numbers = #tpu.dot_dimension_numbers<[1], [0], [0], [1], [0, 0, 1, 1], [], []>} : vector<8x128xf32>, vector<128x128xf32>, vector<8x128xf32> -> vector<8x128xf32>
    %24 = vector.broadcast %22 : vector<1x128xf32> to vector<8x128xf32>
    %25 = arith.addf %23, %24 : vector<8x128xf32>
    %cst_15 = arith.constant 0.000000e+00 : f32
    %26 = vector.broadcast %cst_15 : f32 to vector<8x128xf32>
    %27 = arith.cmpf ogt, %25, %26 : vector<8x128xf32>
    %cst_16 = arith.constant 2.000000e-01 : f32
    %28 = vector.broadcast %cst_16 : f32 to vector<8x128xf32>
    %29 = arith.mulf %28, %25 : vector<8x128xf32>
    %30 = arith.select %27, %25, %29 : vector<8x128xi1>, vector<8x128xf32>
    %c0_17 = arith.constant 0 : index
    %c0_18 = arith.constant 0 : index
    %31 = vector.load %arg6[%c0_17, %c0_18] : memref<128x128xf32, #tpu.memory_space<vmem>>, vector<128x128xf32>
    %c0_19 = arith.constant 0 : index
    %c0_20 = arith.constant 0 : index
    %32 = vector.load %arg7[%c0_19, %c0_20] : memref<1x128xf32, #tpu.memory_space<vmem>>, vector<1x128xf32>
    %cst_21 = arith.constant dense<0.000000e+00> : vector<8x128xf32>
    %33 = tpu.matmul %30, %31, %cst_21 {dimension_numbers = #tpu.dot_dimension_numbers<[1], [0], [0], [1], [0, 0, 1, 1], [], []>} : vector<8x128xf32>, vector<128x128xf32>, vector<8x128xf32> -> vector<8x128xf32>
    %34 = vector.broadcast %32 : vector<1x128xf32> to vector<8x128xf32>
    %35 = arith.addf %33, %34 : vector<8x128xf32>
    %cst_22 = arith.constant 0.000000e+00 : f32
    %36 = vector.broadcast %cst_22 : f32 to vector<8x128xf32>
    %37 = arith.cmpf ogt, %35, %36 : vector<8x128xf32>
    %cst_23 = arith.constant 2.000000e-01 : f32
    %38 = vector.broadcast %cst_23 : f32 to vector<8x128xf32>
    %39 = arith.mulf %38, %35 : vector<8x128xf32>
    %40 = arith.select %37, %35, %39 : vector<8x128xi1>, vector<8x128xf32>
    %c0_24 = arith.constant 0 : index
    %c0_25 = arith.constant 0 : index
    %41 = vector.load %arg8[%c0_24, %c0_25] : memref<8x128xf32, #tpu.memory_space<vmem>>, vector<8x128xf32>
    tpu.vector_store %arg8[%c0_24, %c0_25], %40 {strides = array<i32>} : memref<8x128xf32, #tpu.memory_space<vmem>>, vector<8x128xf32>,
    return
  }
  func.func @transform_0(%arg0: i32) -> (i32, i32) {
    %c0_i32 = arith.constant 0 : i32
    %c0_i32_0 = arith.constant 0 : i32
    return %arg0, %c0_i32 : i32, i32
  }
  func.func @transform_1(%arg0: i32) -> (i32, i32) {
    %c0_i32 = arith.constant 0 : i32
    %c0_i32_0 = arith.constant 0 : i32
    %c0_i32_1 = arith.constant 0 : i32
    return %c0_i32, %c0_i32_0 : i32, i32
  }
  func.func @transform_2(%arg0: i32) -> (i32, i32) {
    %c0_i32 = arith.constant 0 : i32
    %c0_i32_0 = arith.constant 0 : i32
    %c0_i32_1 = arith.constant 0 : i32
    return %c0_i32, %c0_i32_0 : i32, i32
  }
  func.func @transform_3(%arg0: i32) -> (i32, i32) {
    %c0_i32 = arith.constant 0 : i32
    %c0_i32_0 = arith.constant 0 : i32
    %c0_i32_1 = arith.constant 0 : i32
    return %c0_i32, %c0_i32_0 : i32, i32
  }
  func.func @transform_4(%arg0: i32) -> (i32, i32) {
    %c0_i32 = arith.constant 0 : i32
    %c0_i32_0 = arith.constant 0 : i32
    %c0_i32_1 = arith.constant 0 : i32
    return %c0_i32, %c0_i32_0 : i32, i32
  }
  func.func @transform_5(%arg0: i32) -> (i32, i32) {
    %c0_i32 = arith.constant 0 : i32
    %c0_i32_0 = arith.constant 0 : i32
    %c0_i32_1 = arith.constant 0 : i32
    return %c0_i32, %c0_i32_0 : i32, i32
  }
  func.func @transform_6(%arg0: i32) -> (i32, i32) {
    %c0_i32 = arith.constant 0 : i32
    %c0_i32_0 = arith.constant 0 : i32
    %c0_i32_1 = arith.constant 0 : i32
    return %c0_i32, %c0_i32_0 : i32, i32
  }
  func.func @transform_7(%arg0: i32) -> (i32, i32) {
    %c0_i32 = arith.constant 0 : i32
    %c0_i32_0 = arith.constant 0 : i32
    return %arg0, %c0_i32 : i32, i32
  }
}

module attributes {stable_mosaic.version = 11 : i64} {
  func.func @kernel(%arg0: i32, %arg1: memref<8x128xf32, #tpu.memory_space<vmem>>, %arg2: memref<128x128xf32, #tpu.memory_space<vmem>>, %arg3: memref<1x128xf32, #tpu.memory_space<vmem>>, %arg4: memref<128x128xf32, #tpu.memory_space<vmem>>, %arg5: memref<1x128xf32, #tpu.memory_space<vmem>>, %arg6: memref<128x128xf32, #tpu.memory_space<vmem>>, %arg7: memref<1x128xf32, #tpu.memory_space<vmem>>, %arg8: memref<8x128xf32, #tpu.memory_space<vmem>>) attributes {dimension_semantics = [#tpu.dimension_semantics<parallel>], iteration_bounds = array<i64: 2>, scalar_prefetch = 0 : i64, scratch_operands = 0 : i64, tpu.core_type = #tpu.core_type<tc>, window_params = [{transform_indices = @transform_0, window_bounds = array<i64: 8, 128>}, {pipeline_mode = #tpu.pipeline_mode<synchronous>, transform_indices = @transform_1, window_bounds = array<i64: 128, 128>}, {pipeline_mode = #tpu.pipeline_mode<synchronous>, transform_indices = @transform_2, window_bounds = array<i64: 1, 128>}, {pipeline_mode = #tpu.pipeline_mode<synchronous>, transform_indices = @transform_3, window_bounds = array<i64: 128, 128>}, {pipeline_mode = #tpu.pipeline_mode<synchronous>, transform_indices = @transform_4, window_bounds = array<i64: 1, 128>}, {pipeline_mode = #tpu.pipeline_mode<synchronous>, transform_indices = @transform_5, window_bounds = array<i64: 128, 128>}, {pipeline_mode = #tpu.pipeline_mode<synchronous>, transform_indices = @transform_6, window_bounds = array<i64: 1, 128>}, {transform_indices = @transform_7, window_bounds = array<i64: 8, 128>}]} {
    %c0 = arith.constant 0 : index
    %c0_0 = arith.constant 0 : index
    %0 = vector.load %arg1[%c0, %c0_0] : memref<8x128xf32, #tpu.memory_space<vmem>>, vector<8x128xf32>
    %1 = arith.mulf %0, %0 : vector<8x128xf32>
    %cst = arith.constant dense<0.000000e+00> : vector<8xf32>
    %2 = vector.multi_reduction <add>, %1, %cst [1] : vector<8x128xf32> to vector<8xf32>
    %3 = vector.shape_cast %2 : vector<8xf32> to vector<8x1xf32>
    %cst_1 = arith.constant 3.125000e-02 : f32
    %4 = vector.broadcast %cst_1 : f32 to vector<8x1xf32>
    %5 = arith.mulf %3, %4 : vector<8x1xf32>
    %cst_2 = arith.constant 9.99999993E-9 : f32
    %6 = vector.broadcast %cst_2 : f32 to vector<8x1xf32>
    %7 = arith.addf %5, %6 : vector<8x1xf32>
    %8 = math.rsqrt %7 : vector<8x1xf32>
    %9 = vector.broadcast %8 : vector<8x1xf32> to vector<8x128xf32>
    %10 = arith.mulf %0, %9 : vector<8x128xf32>
    %c0_3 = arith.constant 0 : index
    %c0_4 = arith.constant 0 : index
    %11 = vector.load %arg2[%c0_3, %c0_4] : memref<128x128xf32, #tpu.memory_space<vmem>>, vector<128x128xf32>
    %c0_5 = arith.constant 0 : index
    %c0_6 = arith.constant 0 : index
    %12 = vector.load %arg3[%c0_5, %c0_6] : memref<1x128xf32, #tpu.memory_space<vmem>>, vector<1x128xf32>
    %cst_7 = arith.constant dense<0.000000e+00> : vector<8x128xf32>
    %13 = tpu.matmul %10, %11, %cst_7 {dimension_numbers = #tpu.dot_dimension_numbers<[1], [0], [0], [1], [0, 0, 1, 1], [], []>} : vector<8x128xf32>, vector<128x128xf32>, vector<8x128xf32> -> vector<8x128xf32>
    %14 = vector.broadcast %12 : vector<1x128xf32> to vector<8x128xf32>
    %15 = arith.addf %13, %14 : vector<8x128xf32>
    %cst_8 = arith.constant 0.000000e+00 : f32
    %16 = vector.broadcast %cst_8 : f32 to vector<8x128xf32>
    %17 = arith.cmpf ogt, %15, %16 : vector<8x128xf32>
    %cst_9 = arith.constant 2.000000e-01 : f32
    %18 = vector.broadcast %cst_9 : f32 to vector<8x128xf32>
    %19 = arith.mulf %18, %15 : vector<8x128xf32>
    %20 = arith.select %17, %15, %19 : vector<8x128xi1>, vector<8x128xf32>
    %c0_10 = arith.constant 0 : index
    %c0_11 = arith.constant 0 : index
    %21 = vector.load %arg4[%c0_10, %c0_11] : memref<128x128xf32, #tpu.memory_space<vmem>>, vector<128x128xf32>
    %c0_12 = arith.constant 0 : index
    %c0_13 = arith.constant 0 : index
    %22 = vector.load %arg5[%c0_12, %c0_13] : memref<1x128xf32, #tpu.memory_space<vmem>>, vector<1x128xf32>
    %cst_14 = arith.constant dense<0.000000e+00> : vector<8x128xf32>
    %23 = tpu.matmul %20, %21, %cst_14 {dimension_numbers = #tpu.dot_dimension_numbers<[1], [0], [0], [1], [0, 0, 1, 1], [], []>} : vector<8x128xf32>, vector<128x128xf32>, vector<8x128xf32> -> vector<8x128xf32>
    %24 = vector.broadcast %22 : vector<1x128xf32> to vector<8x128xf32>
    %25 = arith.addf %23, %24 : vector<8x128xf32>
    %cst_15 = arith.constant 0.000000e+00 : f32
    %26 = vector.broadcast %cst_15 : f32 to vector<8x128xf32>
    %27 = arith.cmpf ogt, %25, %26 : vector<8x128xf32>
    %cst_16 = arith.constant 2.000000e-01 : f32
    %28 = vector.broadcast %cst_16 : f32 to vector<8x128xf32>
    %29 = arith.mulf %28, %25 : vector<8x128xf32>
    %30 = arith.select %27, %25, %29 : vector<8x128xi1>, vector<8x128xf32>
    %c0_17 = arith.constant 0 : index
    %c0_18 = arith.constant 0 : index
    %31 = vector.load %arg6[%c0_17, %c0_18] : memref<128x128xf32, #tpu.memory_space<vmem>>, vector<128x128xf32>
    %c0_19 = arith.constant 0 : index
    %c0_20 = arith.constant 0 : index
    %32 = vector.load %arg7[%c0_19, %c0_20] : memref<1x128xf32, #tpu.memory_space<vmem>>, vector<1x128xf32>
    %cst_21 = arith.constant dense<0.000000e+00> : vector<8x128xf32>
    %33 = tpu.matmul %30, %31, %cst_21 {dimension_numbers = #tpu.dot_dimension_numbers<[1], [0], [0], [1], [0, 0, 1, 1], [], []>} : vector<8x128xf32>, vector<128x128xf32>, vector<8x128xf32> -> vector<8x128xf32>
    %34 = vector.broadcast %32 : vector<1x128xf32> to vector<8x128xf32>
    %35 = arith.addf %33, %34 : vector<8x128xf32>
    %cst_22 = arith.constant 0.000000e+00 : f32
    %36 = vector.broadcast %cst_22 : f32 to vector<8x128xf32>
    %37 = arith.cmpf ogt, %35, %36 : vector<8x128xf32>
    %cst_23 = arith.constant 2.000000e-01 : f32
    %38 = vector.broadcast %cst_23 : f32 to vector<8x128xf32>
    %39 = arith.mulf %38, %35 : vector<8x128xf32>
    %40 = arith.select %37, %35, %39 : vector<8x128xi1>, vector<8x128xf32>
    %c0_24 = arith.constant 0 : index
    %c0_25 = arith.constant 0 : index
    %41 = vector.load %arg8[%c0_24, %c0_25] : memref<8x128xf32, #tpu.memory_space<vmem>>, vector<8x128xf32>
    tpu.vector_store %arg8[%c0_24, %c0_25], %40 {strides = array<i32>} : memref<8x128xf32, #tpu.memory_space<vmem>>, vector<8x128xf32>,
    return
  }
  func.func @transform_0(%arg0: i32) -> (i32, i32) {
    %c0_i32 = arith.constant 0 : i32
    %c0_i32_0 = arith.constant 0 : i32
    return %arg0, %c0_i32 : i32, i32
  }
  func.func @transform_1(%arg0: i32) -> (i32, i32) {
    %c0_i32 = arith.constant 0 : i32
    %c0_i32_0 = arith.constant 0 : i32
    %c0_i32_1 = arith.constant 0 : i32
    return %c0_i32, %c0_i32_0 : i32, i32
  }
  func.func @transform_2(%arg0: i32) -> (i32, i32) {
    %c0_i32 = arith.constant 0 : i32
    %c0_i32_0 = arith.constant 0 : i32
    %c0_i32_1 = arith.constant 0 : i32
    return %c0_i32, %c0_i32_0 : i32, i32
  }
  func.func @transform_3(%arg0: i32) -> (i32, i32) {
    %c0_i32 = arith.constant 0 : i32
    %c0_i32_0 = arith.constant 0 : i32
    %c0_i32_1 = arith.constant 0 : i32
    return %c0_i32, %c0_i32_0 : i32, i32
  }
  func.func @transform_4(%arg0: i32) -> (i32, i32) {
    %c0_i32 = arith.constant 0 : i32
    %c0_i32_0 = arith.constant 0 : i32
    %c0_i32_1 = arith.constant 0 : i32
    return %c0_i32, %c0_i32_0 : i32, i32
  }
  func.func @transform_5(%arg0: i32) -> (i32, i32) {
    %c0_i32 = arith.constant 0 : i32
    %c0_i32_0 = arith.constant 0 : i32
    %c0_i32_1 = arith.constant 0 : i32
    return %c0_i32, %c0_i32_0 : i32, i32
  }
  func.func @transform_6(%arg0: i32) -> (i32, i32) {
    %c0_i32 = arith.constant 0 : i32
    %c0_i32_0 = arith.constant 0 : i32
    %c0_i32_1 = arith.constant 0 : i32
    return %c0_i32, %c0_i32_0 : i32, i32
  }
  func.func @transform_7(%arg0: i32) -> (i32, i32) {
    %c0_i32 = arith.constant 0 : i32
    %c0_i32_0 = arith.constant 0 : i32
    return %arg0, %c0_i32 : i32, i32
  }
}

</mosaic_0001>

<llo_original>
// kernel: tpu_custom_call.1
$region0: #{tpu_custom_call.1}
  #allocation0 [shape = 'u32[]', space=smem, size = 0x4, offset = 0x4, fixed_abs, tag = 'smem constant byte address 0x4 - core index']
  #allocation1 [shape = 'u32[144,128]{1,0:T(1,128)}', space=vmem, size = 0x12000, scoped, tag = 'internal scratch']
  %s0 = inlined_call_operand.hbm [shape: f32[16,128], index: 0, kind: input, shape index: {}]
  %s1 = inlined_call_operand.hbm [shape: f32[128,128], index: 1, kind: input, shape index: {}]
  %s2 = inlined_call_operand.vmem [shape: f32[1,128], index: 2, kind: input, shape index: {}]
  %s3 = inlined_call_operand.hbm [shape: f32[128,128], index: 3, kind: input, shape index: {}]
  %s4 = inlined_call_operand.vmem [shape: f32[1,128], index: 4, kind: input, shape index: {}]
  %s5 = inlined_call_operand.hbm [shape: f32[128,128], index: 5, kind: input, shape index: {}]
  %s6 = inlined_call_operand.vmem [shape: f32[1,128], index: 6, kind: input, shape index: {}]
  %s7 = inlined_call_operand.hbm [shape: f32[16,128], index: 7, kind: output, shape index: {}]
  %s8 = sld [smem:[#allocation0]]
  $region77: #{tpu_custom_call.1} parent=0
    _
  %s10 = ssub.s32 1, %s8
  %s11 = scalar_select 0, %s10, %s8
  $region1: #{tpu_custom_call.1} parent=0
    #allocation2 [shape = 'u8[8192]{0}', space=vmem, size = 0x2000, scoped, tag = 'input window, operand 0']
    #allocation3 [shape = 's32[2]{0}', space=sflag, size = 0x8, scoped, tag = 'scoped memory for tpu_custom_call.1']
    #allocation4 [shape = 's32[2]{0}', space=sflag, size = 0x8, scoped, tag = 'scoped memory for tpu_custom_call.1']
    #allocation5 [shape = 'u8[65536]{0}', space=vmem, size = 0x10000, scoped, tag = 'input window, operand 1, single buffered']
    #allocation6 [shape = 's32[1]{0}', space=sflag, size = 0x4, scoped, tag = 'scoped memory for tpu_custom_call.1']
    #allocation7 [shape = 'u8[65536]{0}', space=vmem, size = 0x10000, scoped, tag = 'input window, operand 3, single buffered']
    #allocation8 [shape = 'u8[65536]{0}', space=vmem, size = 0x10000, scoped, tag = 'input window, operand 5, single buffered']
    #allocation9 [shape = 's32[1]{0}', space=sflag, size = 0x4, scoped, tag = 'scoped memory for tpu_custom_call.1']
    #allocation10 [shape = 'u8[8192]{0}', space=vmem, size = 0x2000, scoped, tag = 'output window, operand 0']
    %12 = vsyncpa [#allocation3], 0
    %s13 = scalar_lea.sflag [#allocation3], 1
    %14 = vsyncpa %s13, 0
    %15 = vsyncpa [#allocation6], 0
    %16 = vsyncpa [#allocation9], 0
    %17 = vsyncpa [#allocation4], 0
    %s18 = scalar_lea.sflag [#allocation4], 1
    %19 = vsyncpa %s18, 0
    loop: start=0, step=1, limit=4
    $region2: #{tpu_custom_call.1} parent=1 // loop_pre_header
      _
    $region3: #{tpu_custom_call.1} parent=1 // loop_header
      %s21 = sphi 0, %s25
      %p22 = scmp.ge.s32.totalorder %s21, 4
      %s31 = sphi 0, %s33
      %s34 = sphi 0, %s31
      %s35 = sphi 0, %s34
      %s51 = sphi 0, %s35
      %s55 = sphi 0, %s55
      %s57 = sphi 0, %s55
      %s58 = sphi 0, %s57
      %s72 = sphi 0, %s58
      %s76 = sphi 0, %s76
      %s78 = sphi 0, %s76
      %s79 = sphi 0, %s78
      %s93 = sphi 0, %s79
      %s97 = sphi 0, %s97
      %s99 = sphi 0, %s97
      %s100 = sphi 0, %s99
      %s114 = sphi 0, %s100
      %s118 = sphi 0, %s118
      %s120 = sphi 0, %s118
      %s121 = sphi 0, %s120
      %s135 = sphi 0, %s121
      %s139 = sphi 0, %s139
      %s141 = sphi 0, %s139
      %s142 = sphi 0, %s141
      %s156 = sphi 0, %s142
      %s160 = sphi 0, %s160
      %s162 = sphi 0, %s160
      %s163 = sphi 0, %s162
      %s177 = sphi 0, %s163
      %s183 = sphi 0, %s185
      %s186 = sphi 0, %s183
      %s187 = sphi 0, %s186
      %s203 = sphi 0, %s187
    $region4: #{tpu_custom_call.1} parent=1 // loop_header_branch
      %24 = sbr.rel (%p22) target = $region8
    $region5: #{tpu_custom_call.1} parent=1 // loop_body
      %s26 = ssub.s32 %s21, 1
      %s27 = ssub.s32 %s21, 2
      %s28 = sadd.s32 %s21, 1
      %s29 = ssub.s32 %s21, %s28
      %p30 = scmp.eq.s32.totalorder %s29, 0
      %s32 = sadd.s32 %s31, 1
      %s33 = scalar_select %p30, %s31, %s32
      %p36 = pneg %p30
      %p37 = scmp.eq.s32.totalorder %s21, 1
      %p38 = por %p36, %p37
      %p39 = scmp.ne.s32.totalorder %s31, %s34
      %p40 = scmp.eq.s32.totalorder %s21, 0
      %p41 = por %p39, %p40
      %p42 = scmp.ne.s32.totalorder %s31, %s34
      %p43 = scmp.eq.s32.totalorder %s26, 1
      %p44 = por %p42, %p43
      %p45 = scmp.ne.s32.totalorder %s34, %s35
      %p46 = scmp.eq.s32.totalorder %s26, 0
      %p47 = por %p45, %p46
      %p48 = scmp.ne.s32.totalorder %s34, %s35
      %p49 = scmp.eq.s32.totalorder %s27, 1
      %p50 = por %p48, %p49
      %p52 = scmp.ne.s32.totalorder %s35, %s51
      %p53 = scmp.eq.s32.totalorder %s27, 0
      %p54 = por %p52, %p53
      %s56 = sadd.s32 %s55, 1
      %p59 = scmp.eq.s32.totalorder %s21, 1
      %p60 = scmp.ne.s32.totalorder %s55, %s57
      %p61 = scmp.eq.s32.totalorder %s21, 0
      %p62 = por %p60, %p61
      %p63 = scmp.ne.s32.totalorder %s55, %s57
      %p64 = scmp.eq.s32.totalorder %s26, 1
      %p65 = por %p63, %p64
      %p66 = scmp.ne.s32.totalorder %s57, %s58
      %p67 = scmp.eq.s32.totalorder %s26, 0
      %p68 = por %p66, %p67
      %p69 = scmp.ne.s32.totalorder %s57, %s58
      %p70 = scmp.eq.s32.totalorder %s27, 1
      %p71 = por %p69, %p70
      %p73 = scmp.ne.s32.totalorder %s58, %s72
      %p74 = scmp.eq.s32.totalorder %s27, 0
      %p75 = por %p73, %p74
      %s77 = sadd.s32 %s76, 1
      %p80 = scmp.eq.s32.totalorder %s21, 1
      %p81 = scmp.ne.s32.totalorder %s76, %s78
      %p82 = scmp.eq.s32.totalorder %s21, 0
      %p83 = por %p81, %p82
      %p84 = scmp.ne.s32.totalorder %s76, %s78
      %p85 = scmp.eq.s32.totalorder %s26, 1
      %p86 = por %p84, %p85
      %p87 = scmp.ne.s32.totalorder %s78, %s79
      %p88 = scmp.eq.s32.totalorder %s26, 0
      %p89 = por %p87, %p88
      %p90 = scmp.ne.s32.totalorder %s78, %s79
      %p91 = scmp.eq.s32.totalorder %s27, 1
      %p92 = por %p90, %p91
      %p94 = scmp.ne.s32.totalorder %s79, %s93
      %p95 = scmp.eq.s32.totalorder %s27, 0
      %p96 = por %p94, %p95
      %s98 = sadd.s32 %s97, 1
      %p101 = scmp.eq.s32.totalorder %s21, 1
      %p102 = scmp.ne.s32.totalorder %s97, %s99
      %p103 = scmp.eq.s32.totalorder %s21, 0
      %p104 = por %p102, %p103
      %p105 = scmp.ne.s32.totalorder %s97, %s99
      %p106 = scmp.eq.s32.totalorder %s26, 1
      %p107 = por %p105, %p106
      %p108 = scmp.ne.s32.totalorder %s99, %s100
      %p109 = scmp.eq.s32.totalorder %s26, 0
      %p110 = por %p108, %p109
      %p111 = scmp.ne.s32.totalorder %s99, %s100
      %p112 = scmp.eq.s32.totalorder %s27, 1
      %p113 = por %p111, %p112
      %p115 = scmp.ne.s32.totalorder %s100, %s114
      %p116 = scmp.eq.s32.totalorder %s27, 0
      %p117 = por %p115, %p116
      %s119 = sadd.s32 %s118, 1
      %p122 = scmp.eq.s32.totalorder %s21, 1
      %p123 = scmp.ne.s32.totalorder %s118, %s120
      %p124 = scmp.eq.s32.totalorder %s21, 0
      %p125 = por %p123, %p124
      %p126 = scmp.ne.s32.totalorder %s118, %s120
      %p127 = scmp.eq.s32.totalorder %s26, 1
      %p128 = por %p126, %p127
      %p129 = scmp.ne.s32.totalorder %s120, %s121
      %p130 = scmp.eq.s32.totalorder %s26, 0
      %p131 = por %p129, %p130
      %p132 = scmp.ne.s32.totalorder %s120, %s121
      %p133 = scmp.eq.s32.totalorder %s27, 1
      %p134 = por %p132, %p133
      %p136 = scmp.ne.s32.totalorder %s121, %s135
      %p137 = scmp.eq.s32.totalorder %s27, 0
      %p138 = por %p136, %p137
      %s140 = sadd.s32 %s139, 1
      %p143 = scmp.eq.s32.totalorder %s21, 1
      %p144 = scmp.ne.s32.totalorder %s139, %s141
      %p145 = scmp.eq.s32.totalorder %s21, 0
      %p146 = por %p144, %p145
      %p147 = scmp.ne.s32.totalorder %s139, %s141
      %p148 = scmp.eq.s32.totalorder %s26, 1
      %p149 = por %p147, %p148
      %p150 = scmp.ne.s32.totalorder %s141, %s142
      %p151 = scmp.eq.s32.totalorder %s26, 0
      %p152 = por %p150, %p151
      %p153 = scmp.ne.s32.totalorder %s141, %s142
      %p154 = scmp.eq.s32.totalorder %s27, 1
      %p155 = por %p153, %p154
      %p157 = scmp.ne.s32.totalorder %s142, %s156
      %p158 = scmp.eq.s32.totalorder %s27, 0
      %p159 = por %p157, %p158
      %s161 = sadd.s32 %s160, 1
      %p164 = scmp.eq.s32.totalorder %s21, 1
      %p165 = scmp.ne.s32.totalorder %s160, %s162
      %p166 = scmp.eq.s32.totalorder %s21, 0
      %p167 = por %p165, %p166
      %p168 = scmp.ne.s32.totalorder %s160, %s162
      %p169 = scmp.eq.s32.totalorder %s26, 1
      %p170 = por %p168, %p169
      %p171 = scmp.ne.s32.totalorder %s162, %s163
      %p172 = scmp.eq.s32.totalorder %s26, 0
      %p173 = por %p171, %p172
      %p174 = scmp.ne.s32.totalorder %s162, %s163
      %p175 = scmp.eq.s32.totalorder %s27, 1
      %p176 = por %p174, %p175
      %p178 = scmp.ne.s32.totalorder %s163, %s177
      %p179 = scmp.eq.s32.totalorder %s27, 0
      %p180 = por %p178, %p179
      %s181 = ssub.s32 %s21, %s28
      %p182 = scmp.eq.s32.totalorder %s181, 0
      %s184 = sadd.s32 %s183, 1
      %s185 = scalar_select %p182, %s183, %s184
      %p188 = pneg %p182
      %p189 = scmp.eq.s32.totalorder %s21, 1
      %p190 = por %p188, %p189
      %p191 = scmp.ne.s32.totalorder %s183, %s186
      %p192 = scmp.eq.s32.totalorder %s21, 0
      %p193 = por %p191, %p192
      %p194 = scmp.ne.s32.totalorder %s183, %s186
      %p195 = scmp.eq.s32.totalorder %s26, 1
      %p196 = por %p194, %p195
      %p197 = scmp.ne.s32.totalorder %s186, %s187
      %p198 = scmp.eq.s32.totalorder %s26, 0
      %p199 = por %p197, %p198
      %p200 = scmp.ne.s32.totalorder %s186, %s187
      %p201 = scmp.eq.s32.totalorder %s27, 1
      %p202 = por %p200, %p201
      %p204 = scmp.ne.s32.totalorder %s187, %s203
      %p205 = scmp.eq.s32.totalorder %s27, 0
      %p206 = por %p204, %p205
      %p207 = scmp.le.s32.totalorder 1, %s21
      %p208 = scmp.lt.s32.totalorder %s21, 3
      %p209 = pnand %p207, %p208
      %p210 = pneg %p209
      // Predicated region
      $region9: #{tpu_custom_call.1} parent=5 // pred_check
        _
      $region10: #{tpu_custom_call.1} parent=5 // pred_check_branch
        %212 = sbr.rel (%p209) target = $region12
      $region11: #{tpu_custom_call.1} parent=5 // pred_region
        %s213 = ssub.s32 %s21, 1
        // Predicated region
        $region13: #{tpu_custom_call.1} parent=11 // pred_check
          %p214 = pneg %p68
        $region14: #{tpu_custom_call.1} parent=11 // pred_check_branch
          %216 = sbr.rel (%p214) target = $region16
        $region15: #{tpu_custom_call.1} parent=11 // pred_region
          %s218 = ssub.s32 2048, 2048
          %219 = vsyncadd [#allocation6], %s218
          %s220 = sshll.u32 [#allocation5], 4
          %s221 = int_to_ptr.vmem [resolvable:$true] %s220
          %226 = dma.hbm_to_vmem [thread:$0]  %s1, 2048, %s221, [#allocation6], 128, 128, 8
        $region16: #{tpu_custom_call.1} parent=11 // pred_fallthru
          _
        // Predicated region
        $region17: #{tpu_custom_call.1} parent=11 // pred_check
          %p227 = pneg %p89
        $region18: #{tpu_custom_call.1} parent=11 // pred_check_branch
          %229 = sbr.rel (%p227) target = $region20
        $region19: #{tpu_custom_call.1} parent=11 // pred_region
          _
        $region20: #{tpu_custom_call.1} parent=11 // pred_fallthru
          _
        // Predicated region
        $region21: #{tpu_custom_call.1} parent=11 // pred_check
          %p230 = pneg %p110
        $region22: #{tpu_custom_call.1} parent=11 // pred_check_branch
          %232 = sbr.rel (%p230) target = $region24
        $region23: #{tpu_custom_call.1} parent=11 // pred_region
          %s234 = ssub.s32 2048, 2048
          %235 = vsyncadd [#allocation6], %s234
          %s236 = sshll.u32 [#allocation7], 4
          %s237 = int_to_ptr.vmem [resolvable:$true] %s236
          %242 = dma.hbm_to_vmem [thread:$0]  %s3, 2048, %s237, [#allocation6], 128, 128, 8
        $region24: #{tpu_custom_call.1} parent=11 // pred_fallthru
          _
        // Predicated region
        $region25: #{tpu_custom_call.1} parent=11 // pred_check
          %p243 = pneg %p131
        $region26: #{tpu_custom_call.1} parent=11 // pred_check_branch
          %245 = sbr.rel (%p243) target = $region28
        $region27: #{tpu_custom_call.1} parent=11 // pred_region
          _
        $region28: #{tpu_custom_call.1} parent=11 // pred_fallthru
          _
        // Predicated region
        $region29: #{tpu_custom_call.1} parent=11 // pred_check
          %p246 = pneg %p152
        $region30: #{tpu_custom_call.1} parent=11 // pred_check_branch
          %248 = sbr.rel (%p246) target = $region32
        $region31: #{tpu_custom_call.1} parent=11 // pred_region
          %s250 = ssub.s32 2048, 2048
          %251 = vsyncadd [#allocation9], %s250
          %s252 = sshll.u32 [#allocation8], 4
          %s253 = int_to_ptr.vmem [resolvable:$true] %s252
          %258 = dma.hbm_to_vmem [thread:$0]  %s5, 2048, %s253, [#allocation9], 128, 128, 8
        $region32: #{tpu_custom_call.1} parent=11 // pred_fallthru
          _
        // Predicated region
        $region33: #{tpu_custom_call.1} parent=11 // pred_check
          %p259 = pneg %p173
        $region34: #{tpu_custom_call.1} parent=11 // pred_check_branch
          %261 = sbr.rel (%p259) target = $region36
        $region35: #{tpu_custom_call.1} parent=11 // pred_region
          _
        $region36: #{tpu_custom_call.1} parent=11 // pred_fallthru
          _
      $region12: #{tpu_custom_call.1} parent=5 // pred_fallthru
        _
      %p262 = scmp.lt.s32.totalorder %s21, 2
      // Predicated region
      $region37: #{tpu_custom_call.1} parent=5 // pred_check
        %p263 = pneg %p262
      $region38: #{tpu_custom_call.1} parent=5 // pred_check_branch
        %265 = sbr.rel (%p263) target = $region40
      $region39: #{tpu_custom_call.1} parent=5 // pred_region
        // Predicated region
        $region41: #{tpu_custom_call.1} parent=39 // pred_check
          %p266 = pneg %p41
        $region42: #{tpu_custom_call.1} parent=39 // pred_check_branch
          %268 = sbr.rel (%p266) target = $region44
        $region43: #{tpu_custom_call.1} parent=39 // pred_region
          %s269 = sand.u32 %s31, 1
          %s270 = scalar_lea.sflag [#allocation3], %s269
          %s271 = sand.u32 %s31, 1
          %s272 = smul.addr %s271, 8
          %s273 = scalar_lea.vmem [#allocation2], %s272
          %s275 = ssub.s32 128, 128
          %276 = vsyncadd %s270, %s275
          %s277 = smul.addr %s21, 128
          %s278 = scalar_lea.hbm %s0, %s277
          %s280 = sshll.u32 %s273, 4
          %s281 = int_to_ptr.vmem [resolvable:$true] %s280
          %283 = dma.hbm_to_vmem [thread:$0]  %s278, 128, %s281, %s270
        $region44: #{tpu_custom_call.1} parent=39 // pred_fallthru
          _
      $region40: #{tpu_custom_call.1} parent=5 // pred_fallthru
        _
      %p284 = scmp.le.s32.totalorder 1, %s21
      %p285 = scmp.lt.s32.totalorder %s21, 3
      %p286 = pnand %p284, %p285
      %p287 = pneg %p286
      // Predicated region
      $region45: #{tpu_custom_call.1} parent=5 // pred_check
        _
      $region46: #{tpu_custom_call.1} parent=5 // pred_check_branch
        %289 = sbr.rel (%p286) target = $region48
      $region47: #{tpu_custom_call.1} parent=5 // pred_region
        %s290 = ssub.s32 %s21, 1
        %s291 = sand.u32 %s34, 1
        %s292 = scalar_lea.sflag [#allocation3], %s291
        %s293 = sand.u32 %s34, 1
        %s294 = smul.addr %s293, 8
        %s295 = scalar_lea.vmem [#allocation2], %s294
        // Predicated region
        $region49: #{tpu_custom_call.1} parent=47 // pred_check
          %p296 = pneg %p47
        $region50: #{tpu_custom_call.1} parent=47 // pred_check_branch
          %298 = sbr.rel (%p296) target = $region52
        $region51: #{tpu_custom_call.1} parent=47 // pred_region
          %299 = dma.done %s292, 128
        $region52: #{tpu_custom_call.1} parent=47 // pred_fallthru
          _
        // Predicated region
        $region53: #{tpu_custom_call.1} parent=47 // pred_check
          %p300 = pneg %p68
        $region54: #{tpu_custom_call.1} parent=47 // pred_check_branch
          %302 = sbr.rel (%p300) target = $region56
        $region55: #{tpu_custom_call.1} parent=47 // pred_region
          %303 = dma.done [#allocation6], 2048
        $region56: #{tpu_custom_call.1} parent=47 // pred_fallthru
          _
        // Predicated region
        $region57: #{tpu_custom_call.1} parent=47 // pred_check
          %p304 = pneg %p110
        $region58: #{tpu_custom_call.1} parent=47 // pred_check_branch
          %306 = sbr.rel (%p304) target = $region60
        $region59: #{tpu_custom_call.1} parent=47 // pred_region
          %307 = dma.done [#allocation6], 2048
        $region60: #{tpu_custom_call.1} parent=47 // pred_fallthru
          _
        // Predicated region
        $region61: #{tpu_custom_call.1} parent=47 // pred_check
          %p308 = pneg %p152
        $region62: #{tpu_custom_call.1} parent=47 // pred_check_branch
          %310 = sbr.rel (%p308) target = $region64
        $region63: #{tpu_custom_call.1} parent=47 // pred_region
          %311 = dma.done [#allocation9], 2048
        $region64: #{tpu_custom_call.1} parent=47 // pred_fallthru
          _
        %s312 = sand.u32 %s34, 1
        %s313 = scalar_lea.sflag [#allocation3], %s312
        %s314 = sand.u32 %s34, 1
        %s315 = smul.addr %s314, 8
        %s316 = scalar_lea.vmem [#allocation2], %s315
        %p317 = pneg %p47
        %p318 = pneg %p44
        %p319 = pneg %p68
        %p320 = pneg %p65
        %p321 = pneg %p89
        %p322 = pneg %p86
        %p323 = pneg %p110
        %p324 = pneg %p107
        %p325 = pneg %p131
        %p326 = pneg %p128
        %p327 = pneg %p152
        %p328 = pneg %p149
        %p329 = pneg %p173
        %p330 = pneg %p170
        %p331 = pneg %p199
        %p332 = pneg %p196
        %s333 = sand.u32 %s186, 1
        %s334 = scalar_lea.sflag [#allocation4], %s333
        %s335 = sand.u32 %s186, 1
        %s336 = smul.addr %s335, 8
        %s337 = scalar_lea.vmem [#allocation10], %s336
        %v338 = vld [vmem:[%s295] sm:$0xff]
        %v339 = vmul.f32 %v338, %v338
        %340 = vadd.xlane.f32.xlu0 %v339
        %v341 = vpop.xlane.xlu0 %340
        %v342 = vmul.f32 %v341, 0.03125
        %v343 = vadd.f32 %v342, 1e-08
        %v344 = vrsqrt.pop %v343
        %v345 = vmul.f32 %v338, %v344
        %v346 = vld [vmem:[#allocation5] sm:$0xff]
        %v347 = vld [vmem:[#allocation5 + $0x8] sm:$0xff]
        %v348 = vld [vmem:[#allocation5 + $0x10] sm:$0xff]
        %v349 = vld [vmem:[#allocation5 + $0x18] sm:$0xff]
        %v350 = vld [vmem:[#allocation5 + $0x20] sm:$0xff]
        %v351 = vld [vmem:[#allocation5 + $0x28] sm:$0xff]
        %v352 = vld [vmem:[#allocation5 + $0x30] sm:$0xff]
        %v353 = vld [vmem:[#allocation5 + $0x38] sm:$0xff]
        %v354 = vld [vmem:[#allocation5 + $0x40] sm:$0xff]
        %v355 = vld [vmem:[#allocation5 + $0x48] sm:$0xff]
        %v356 = vld [vmem:[#allocation5 + $0x50] sm:$0xff]
        %v357 = vld [vmem:[#allocation5 + $0x58] sm:$0xff]
        %v358 = vld [vmem:[#allocation5 + $0x60] sm:$0xff]
        %v359 = vld [vmem:[#allocation5 + $0x68] sm:$0xff]
        %v360 = vld [vmem:[#allocation5 + $0x70] sm:$0xff]
        %v361 = vld [vmem:[#allocation5 + $0x78] sm:$0xff]
        %v362 = vld [vmem:[%s2] sm:$0x1]
        %v364 = vlaneseq
        %v365 = vshrl.u32 %v364, 7
        %v366 = vsub.s32 0, %v365
        %v367 = vrot.slane %v362, %v366
        %369 = vmatprep.subr.mxu0 0.0
        %370 = vmatpush1.msra.mxu0 %v346
        %371 = vmatprep.subr.mxu0 0.0
        %372 = vmatpush1.msra.mxu0 %v347
        %373 = vmatprep.subr.mxu0 0.0
        %374 = vmatpush1.msra.mxu0 %v348
        %375 = vmatprep.subr.mxu0 0.0
        %376 = vmatpush1.msra.mxu0 %v349
        %377 = vmatprep.subr.mxu0 0.0
        %378 = vmatpush1.msra.mxu0 %v350
        %379 = vmatprep.subr.mxu0 0.0
        %380 = vmatpush1.msra.mxu0 %v351
        %381 = vmatprep.subr.mxu0 0.0
        %382 = vmatpush1.msra.mxu0 %v352
        %383 = vmatprep.subr.mxu0 0.0
        %384 = vmatpush1.msra.mxu0 %v353
        %385 = vmatprep.subr.mxu0 0.0
        %386 = vmatpush1.msra.mxu0 %v354
        %387 = vmatprep.subr.mxu0 0.0
        %388 = vmatpush1.msra.mxu0 %v355
        %389 = vmatprep.subr.mxu0 0.0
        %390 = vmatpush1.msra.mxu0 %v356
        %391 = vmatprep.subr.mxu0 0.0
        %392 = vmatpush1.msra.mxu0 %v357
        %393 = vmatprep.subr.mxu0 0.0
        %394 = vmatpush1.msra.mxu0 %v358
        %395 = vmatprep.subr.mxu0 0.0
        %396 = vmatpush1.msra.mxu0 %v359
        %397 = vmatprep.subr.mxu0 0.0
        %398 = vmatpush1.msra.mxu0 %v360
        %399 = vmatprep.subr.mxu0 0.0
        %400 = vmatpush1.msra.mxu0 %v361
        %401 = vmatprep.subr.mxu0 0.0
        %402 = vmatpush1.msra.mxu0 0.0
        %403 = vmatprep.subr.mxu0 0.0
        %404 = vmatpush1.msra.mxu0 0.0
        %405 = vmatprep.subr.mxu0 0.0
        %406 = vmatpush1.msra.mxu0 0.0
        %407 = vmatprep.subr.mxu0 0.0
        %408 = vmatpush1.msra.mxu0 0.0
        %409 = vmatprep.subr.mxu0 0.0
        %410 = vmatpush1.msra.mxu0 0.0
        %411 = vmatprep.subr.mxu0 0.0
        %412 = vmatpush1.msra.mxu0 0.0
        %413 = vmatprep.subr.mxu0 0.0
        %414 = vmatpush1.msra.mxu0 0.0
        %415 = vmatprep.subr.mxu0 0.0
        %416 = vmatpush1.msra.mxu0 0.0
        %417 = vmatprep.subr.mxu0 0.0
        %418 = vmatpush1.msra.mxu0 0.0
        %419 = vmatprep.subr.mxu0 0.0
        %420 = vmatpush1.msra.mxu0 0.0
        %421 = vmatprep.subr.mxu0 0.0
        %422 = vmatpush1.msra.mxu0 0.0
        %423 = vmatprep.subr.mxu0 0.0
        %424 = vmatpush1.msra.mxu0 0.0
        %425 = vmatprep.subr.mxu0 0.0
        %426 = vmatpush1.msra.mxu0 0.0
        %427 = vmatprep.subr.mxu0 0.0
        %428 = vmatpush1.msra.mxu0 0.0
        %429 = vmatprep.subr.mxu0 0.0
        %430 = vmatpush1.msra.mxu0 0.0
        %431 = vmatprep.subr.mxu0 0.0
        %432 = vmatpush1.msra.mxu0 0.0
        %433 = vmatprep.mubr.f32.mxu0 0.0
        %434 = vmatmul.mubr.f32.gmra.mrb[0].mxu0 %v345
        %v435 = vpop.f32.mrb[0].mxu0
        %v436 = vadd.f32 %v367, %v435
        %v437 = vpop.f32.mrb[0].mxu0
        %438 = vdwg.mxu0
        %vm439 = vcmp.gt.f32.partialorder %v436, 0.0
        %v440 = vmul.f32 %v436, 0.2
        %v441 = vsel %vm439, %v436, %v440
        %v442 = vld [vmem:[#allocation7] sm:$0xff]
        %v443 = vld [vmem:[#allocation7 + $0x8] sm:$0xff]
        %v444 = vld [vmem:[#allocation7 + $0x10] sm:$0xff]
        %v445 = vld [vmem:[#allocation7 + $0x18] sm:$0xff]
        %v446 = vld [vmem:[#allocation7 + $0x20] sm:$0xff]
        %v447 = vld [vmem:[#allocation7 + $0x28] sm:$0xff]
        %v448 = vld [vmem:[#allocation7 + $0x30] sm:$0xff]
        %v449 = vld [vmem:[#allocation7 + $0x38] sm:$0xff]
        %v450 = vld [vmem:[#allocation7 + $0x40] sm:$0xff]
        %v451 = vld [vmem:[#allocation7 + $0x48] sm:$0xff]
        %v452 = vld [vmem:[#allocation7 + $0x50] sm:$0xff]
        %v453 = vld [vmem:[#allocation7 + $0x58] sm:$0xff]
        %v454 = vld [vmem:[#allocation7 + $0x60] sm:$0xff]
        %v455 = vld [vmem:[#allocation7 + $0x68] sm:$0xff]
        %v456 = vld [vmem:[#allocation7 + $0x70] sm:$0xff]
        %v457 = vld [vmem:[#allocation7 + $0x78] sm:$0xff]
        %v458 = vld [vmem:[%s4] sm:$0x1]
        %v460 = vlaneseq
        %v461 = vshrl.u32 %v460, 7
        %v462 = vsub.s32 0, %v461
        %v463 = vrot.slane %v458, %v462
        %465 = vmatprep.subr.mxu0 0.0
        %466 = vmatpush1.msra.mxu0 %v442
        %467 = vmatprep.subr.mxu0 0.0
        %468 = vmatpush1.msra.mxu0 %v443
        %469 = vmatprep.subr.mxu0 0.0
        %470 = vmatpush1.msra.mxu0 %v444
        %471 = vmatprep.subr.mxu0 0.0
        %472 = vmatpush1.msra.mxu0 %v445
        %473 = vmatprep.subr.mxu0 0.0
        %474 = vmatpush1.msra.mxu0 %v446
        %475 = vmatprep.subr.mxu0 0.0
        %476 = vmatpush1.msra.mxu0 %v447
        %477 = vmatprep.subr.mxu0 0.0
        %478 = vmatpush1.msra.mxu0 %v448
        %479 = vmatprep.subr.mxu0 0.0
        %480 = vmatpush1.msra.mxu0 %v449
        %481 = vmatprep.subr.mxu0 0.0
        %482 = vmatpush1.msra.mxu0 %v450
        %483 = vmatprep.subr.mxu0 0.0
        %484 = vmatpush1.msra.mxu0 %v451
        %485 = vmatprep.subr.mxu0 0.0
        %486 = vmatpush1.msra.mxu0 %v452
        %487 = vmatprep.subr.mxu0 0.0
        %488 = vmatpush1.msra.mxu0 %v453
        %489 = vmatprep.subr.mxu0 0.0
        %490 = vmatpush1.msra.mxu0 %v454
        %491 = vmatprep.subr.mxu0 0.0
        %492 = vmatpush1.msra.mxu0 %v455
        %493 = vmatprep.subr.mxu0 0.0
        %494 = vmatpush1.msra.mxu0 %v456
        %495 = vmatprep.subr.mxu0 0.0
        %496 = vmatpush1.msra.mxu0 %v457
        %497 = vmatprep.subr.mxu0 0.0
        %498 = vmatpush1.msra.mxu0 0.0
        %499 = vmatprep.subr.mxu0 0.0
        %500 = vmatpush1.msra.mxu0 0.0
        %501 = vmatprep.subr.mxu0 0.0
        %502 = vmatpush1.msra.mxu0 0.0
        %503 = vmatprep.subr.mxu0 0.0
        %504 = vmatpush1.msra.mxu0 0.0
        %505 = vmatprep.subr.mxu0 0.0
        %506 = vmatpush1.msra.mxu0 0.0
        %507 = vmatprep.subr.mxu0 0.0
        %508 = vmatpush1.msra.mxu0 0.0
        %509 = vmatprep.subr.mxu0 0.0
        %510 = vmatpush1.msra.mxu0 0.0
        %511 = vmatprep.subr.mxu0 0.0
        %512 = vmatpush1.msra.mxu0 0.0
        %513 = vmatprep.subr.mxu0 0.0
        %514 = vmatpush1.msra.mxu0 0.0
        %515 = vmatprep.subr.mxu0 0.0
        %516 = vmatpush1.msra.mxu0 0.0
        %517 = vmatprep.subr.mxu0 0.0
        %518 = vmatpush1.msra.mxu0 0.0
        %519 = vmatprep.subr.mxu0 0.0
        %520 = vmatpush1.msra.mxu0 0.0
        %521 = vmatprep.subr.mxu0 0.0
        %522 = vmatpush1.msra.mxu0 0.0
        %523 = vmatprep.subr.mxu0 0.0
        %524 = vmatpush1.msra.mxu0 0.0
        %525 = vmatprep.subr.mxu0 0.0
        %526 = vmatpush1.msra.mxu0 0.0
        %527 = vmatprep.subr.mxu0 0.0
        %528 = vmatpush1.msra.mxu0 0.0
        %529 = vmatprep.mubr.f32.mxu0 0.0
        %530 = vmatmul.mubr.f32.gmra.mrb[0].mxu0 %v441
        %v531 = vpop.f32.mrb[0].mxu0
        %v532 = vadd.f32 %v463, %v531
        %v533 = vpop.f32.mrb[0].mxu0
        %534 = vdwg.mxu0
        %vm535 = vcmp.gt.f32.partialorder %v532, 0.0
        %v536 = vmul.f32 %v532, 0.2
        %v537 = vsel %vm535, %v532, %v536
        %v538 = vld [vmem:[#allocation8] sm:$0xff]
        %v539 = vld [vmem:[#allocation8 + $0x8] sm:$0xff]
        %v540 = vld [vmem:[#allocation8 + $0x10] sm:$0xff]
        %v541 = vld [vmem:[#allocation8 + $0x18] sm:$0xff]
        %v542 = vld [vmem:[#allocation8 + $0x20] sm:$0xff]
        %v543 = vld [vmem:[#allocation8 + $0x28] sm:$0xff]
        %v544 = vld [vmem:[#allocation8 + $0x30] sm:$0xff]
        %v545 = vld [vmem:[#allocation8 + $0x38] sm:$0xff]
        %v546 = vld [vmem:[#allocation8 + $0x40] sm:$0xff]
        %v547 = vld [vmem:[#allocation8 + $0x48] sm:$0xff]
        %v548 = vld [vmem:[#allocation8 + $0x50] sm:$0xff]
        %v549 = vld [vmem:[#allocation8 + $0x58] sm:$0xff]
        %v550 = vld [vmem:[#allocation8 + $0x60] sm:$0xff]
        %v551 = vld [vmem:[#allocation8 + $0x68] sm:$0xff]
        %v552 = vld [vmem:[#allocation8 + $0x70] sm:$0xff]
        %v553 = vld [vmem:[#allocation8 + $0x78] sm:$0xff]
        %v554 = vld [vmem:[%s6] sm:$0x1]
        %v556 = vlaneseq
        %v557 = vshrl.u32 %v556, 7
        %v558 = vsub.s32 0, %v557
        %v559 = vrot.slane %v554, %v558
        %561 = vmatprep.subr.mxu0 0.0
        %562 = vmatpush1.msra.mxu0 %v538
        %563 = vmatprep.subr.mxu0 0.0
        %564 = vmatpush1.msra.mxu0 %v539
        %565 = vmatprep.subr.mxu0 0.0
        %566 = vmatpush1.msra.mxu0 %v540
        %567 = vmatprep.subr.mxu0 0.0
        %568 = vmatpush1.msra.mxu0 %v541
        %569 = vmatprep.subr.mxu0 0.0
        %570 = vmatpush1.msra.mxu0 %v542
        %571 = vmatprep.subr.mxu0 0.0
        %572 = vmatpush1.msra.mxu0 %v543
        %573 = vmatprep.subr.mxu0 0.0
        %574 = vmatpush1.msra.mxu0 %v544
        %575 = vmatprep.subr.mxu0 0.0
        %576 = vmatpush1.msra.mxu0 %v545
        %577 = vmatprep.subr.mxu0 0.0
        %578 = vmatpush1.msra.mxu0 %v546
        %579 = vmatprep.subr.mxu0 0.0
        %580 = vmatpush1.msra.mxu0 %v547
        %581 = vmatprep.subr.mxu0 0.0
        %582 = vmatpush1.msra.mxu0 %v548
        %583 = vmatprep.subr.mxu0 0.0
        %584 = vmatpush1.msra.mxu0 %v549
        %585 = vmatprep.subr.mxu0 0.0
        %586 = vmatpush1.msra.mxu0 %v550
        %587 = vmatprep.subr.mxu0 0.0
        %588 = vmatpush1.msra.mxu0 %v551
        %589 = vmatprep.subr.mxu0 0.0
        %590 = vmatpush1.msra.mxu0 %v552
        %591 = vmatprep.subr.mxu0 0.0
        %592 = vmatpush1.msra.mxu0 %v553
        %593 = vmatprep.subr.mxu0 0.0
        %594 = vmatpush1.msra.mxu0 0.0
        %595 = vmatprep.subr.mxu0 0.0
        %596 = vmatpush1.msra.mxu0 0.0
        %597 = vmatprep.subr.mxu0 0.0
        %598 = vmatpush1.msra.mxu0 0.0
        %599 = vmatprep.subr.mxu0 0.0
        %600 = vmatpush1.msra.mxu0 0.0
        %601 = vmatprep.subr.mxu0 0.0
        %602 = vmatpush1.msra.mxu0 0.0
        %603 = vmatprep.subr.mxu0 0.0
        %604 = vmatpush1.msra.mxu0 0.0
        %605 = vmatprep.subr.mxu0 0.0
        %606 = vmatpush1.msra.mxu0 0.0
        %607 = vmatprep.subr.mxu0 0.0
        %608 = vmatpush1.msra.mxu0 0.0
        %609 = vmatprep.subr.mxu0 0.0
        %610 = vmatpush1.msra.mxu0 0.0
        %611 = vmatprep.subr.mxu0 0.0
        %612 = vmatpush1.msra.mxu0 0.0
        %613 = vmatprep.subr.mxu0 0.0
        %614 = vmatpush1.msra.mxu0 0.0
        %615 = vmatprep.subr.mxu0 0.0
        %616 = vmatpush1.msra.mxu0 0.0
        %617 = vmatprep.subr.mxu0 0.0
        %618 = vmatpush1.msra.mxu0 0.0
        %619 = vmatprep.subr.mxu0 0.0
        %620 = vmatpush1.msra.mxu0 0.0
        %621 = vmatprep.subr.mxu0 0.0
        %622 = vmatpush1.msra.mxu0 0.0
        %623 = vmatprep.subr.mxu0 0.0
        %624 = vmatpush1.msra.mxu0 0.0
        %625 = vmatprep.mubr.f32.mxu0 0.0
        %626 = vmatmul.mubr.f32.gmra.mrb[0].mxu0 %v537
        %v627 = vpop.f32.mrb[0].mxu0
        %v628 = vadd.f32 %v559, %v627
        %v629 = vpop.f32.mrb[0].mxu0
        %630 = vdwg.mxu0
        %vm631 = vcmp.gt.f32.partialorder %v628, 0.0
        %v632 = vmul.f32 %v628, 0.2
        %v633 = vsel %vm631, %v628, %v632
        %634 = vst [vmem:[%s337] sm:$0xff] %v633
        %s635 = sand.u32 %s186, 1
        %s636 = scalar_lea.sflag [#allocation4], %s635
        %s637 = sand.u32 %s186, 1
        %s638 = smul.addr %s637, 8
        %s639 = scalar_lea.vmem [#allocation10], %s638
        // Predicated region
        $region65: #{tpu_custom_call.1} parent=47 // pred_check
          %p640 = pneg %p196
        $region66: #{tpu_custom_call.1} parent=47 // pred_check_branch
          %642 = sbr.rel (%p640) target = $region68
        $region67: #{tpu_custom_call.1} parent=47 // pred_region
          %s644 = ssub.s32 128, 128
          %645 = vsyncadd %s636, %s644
          %s646 = smul.addr %s26, 128
          %s647 = scalar_lea.hbm %s7, %s646
          %s649 = sshll.u32 %s639, 4
          %s650 = int_to_ptr.vmem [resolvable:$true] %s649
          %652 = dma.vmem_to_hbm [thread:$0]  %s650, 128, %s647, %s636
        $region68: #{tpu_custom_call.1} parent=47 // pred_fallthru
          _
      $region48: #{tpu_custom_call.1} parent=5 // pred_fallthru
        _
      %p653 = scmp.le.s32.totalorder 2, %s21
      // Predicated region
      $region69: #{tpu_custom_call.1} parent=5 // pred_check
        %p654 = pneg %p653
      $region70: #{tpu_custom_call.1} parent=5 // pred_check_branch
        %656 = sbr.rel (%p654) target = $region72
      $region71: #{tpu_custom_call.1} parent=5 // pred_region
        %s657 = ssub.s32 %s21, 2
        // Predicated region
        $region73: #{tpu_custom_call.1} parent=71 // pred_check
          %p658 = pneg %p202
        $region74: #{tpu_custom_call.1} parent=71 // pred_check_branch
          %660 = sbr.rel (%p658) target = $region76
        $region75: #{tpu_custom_call.1} parent=71 // pred_region
          %s661 = sand.u32 %s187, 1
          %s662 = scalar_lea.sflag [#allocation4], %s661
          %s663 = sand.u32 %s187, 1
          %s664 = smul.addr %s663, 8
          %s665 = scalar_lea.vmem [#allocation10], %s664
          %666 = dma.done %s662, 128
        $region76: #{tpu_custom_call.1} parent=71 // pred_fallthru
          _
      $region72: #{tpu_custom_call.1} parent=5 // pred_fallthru
        _
    $region6: #{tpu_custom_call.1} parent=1 // loop_footer
      %s25 = sadd.s32 1, %s21
    $region7: #{tpu_custom_call.1} parent=1 // loop_footer_branch
      %20 = sbr.rel target = $region3
    $region8: #{tpu_custom_call.1} parent=1 // loop_exit
      _
    %667 = vsyncpa [#allocation3], 1
    %s668 = scalar_lea.sflag [#allocation3], 1
    %669 = vsyncpa %s668, 1
    %670 = vsyncpa [#allocation6], 1
    %671 = vsyncpa [#allocation9], 1
    %672 = vsyncpa [#allocation4], 1
    %s673 = scalar_lea.sflag [#allocation4], 1
    %674 = vsyncpa %s673, 1

// kernel: tpu_custom_call.1
$region0: #{tpu_custom_call.1}
  #allocation0 [shape = 'u32[]', space=smem, size = 0x4, offset = 0x4, fixed_abs, tag = 'smem constant byte address 0x4 - core index']
  #allocation1 [shape = 'u32[144,128]{1,0:T(1,128)}', space=vmem, size = 0x12000, scoped, tag = 'internal scratch']
  %s0 = inlined_call_operand.hbm [shape: f32[16,128], index: 0, kind: input, shape index: {}]
  %s1 = inlined_call_operand.hbm [shape: f32[128,128], index: 1, kind: input, shape index: {}]
  %s2 = inlined_call_operand.vmem [shape: f32[1,128], index: 2, kind: input, shape index: {}]
  %s3 = inlined_call_operand.hbm [shape: f32[128,128], index: 3, kind: input, shape index: {}]
  %s4 = inlined_call_operand.vmem [shape: f32[1,128], index: 4, kind: input, shape index: {}]
  %s5 = inlined_call_operand.hbm [shape: f32[128,128], index: 5, kind: input, shape index: {}]
  %s6 = inlined_call_operand.vmem [shape: f32[1,128], index: 6, kind: input, shape index: {}]
  %s7 = inlined_call_operand.hbm [shape: f32[16,128], index: 7, kind: output, shape index: {}]
  %s8 = sld [smem:[#allocation0]]
  $region77: #{tpu_custom_call.1} parent=0
    _
  %s10 = ssub.s32 1, %s8
  %s11 = scalar_select 0, %s10, %s8
  $region1: #{tpu_custom_call.1} parent=0
    #allocation2 [shape = 'u8[8192]{0}', space=vmem, size = 0x2000, scoped, tag = 'input window, operand 0']
    #allocation3 [shape = 's32[2]{0}', space=sflag, size = 0x8, scoped, tag = 'scoped memory for tpu_custom_call.1']
    #allocation4 [shape = 's32[2]{0}', space=sflag, size = 0x8, scoped, tag = 'scoped memory for tpu_custom_call.1']
    #allocation5 [shape = 'u8[65536]{0}', space=vmem, size = 0x10000, scoped, tag = 'input window, operand 1, single buffered']
    #allocation6 [shape = 's32[1]{0}', space=sflag, size = 0x4, scoped, tag = 'scoped memory for tpu_custom_call.1']
    #allocation7 [shape = 'u8[65536]{0}', space=vmem, size = 0x10000, scoped, tag = 'input window, operand 3, single buffered']
    #allocation8 [shape = 'u8[65536]{0}', space=vmem, size = 0x10000, scoped, tag = 'input window, operand 5, single buffered']
    #allocation9 [shape = 's32[1]{0}', space=sflag, size = 0x4, scoped, tag = 'scoped memory for tpu_custom_call.1']
    #allocation10 [shape = 'u8[8192]{0}', space=vmem, size = 0x2000, scoped, tag = 'output window, operand 0']
    %12 = vsyncpa [#allocation3], 0
    %s13 = scalar_lea.sflag [#allocation3], 1
    %14 = vsyncpa %s13, 0
    %15 = vsyncpa [#allocation6], 0
    %16 = vsyncpa [#allocation9], 0
    %17 = vsyncpa [#allocation4], 0
    %s18 = scalar_lea.sflag [#allocation4], 1
    %19 = vsyncpa %s18, 0
    loop: start=0, step=1, limit=4
    $region2: #{tpu_custom_call.1} parent=1 // loop_pre_header
      _
    $region3: #{tpu_custom_call.1} parent=1 // loop_header
      %s21 = sphi 0, %s25
      %p22 = scmp.ge.s32.totalorder %s21, 4
      %s31 = sphi 0, %s33
      %s34 = sphi 0, %s31
      %s35 = sphi 0, %s34
      %s51 = sphi 0, %s35
      %s55 = sphi 0, %s55
      %s57 = sphi 0, %s55
      %s58 = sphi 0, %s57
      %s72 = sphi 0, %s58
      %s76 = sphi 0, %s76
      %s78 = sphi 0, %s76
      %s79 = sphi 0, %s78
      %s93 = sphi 0, %s79
      %s97 = sphi 0, %s97
      %s99 = sphi 0, %s97
      %s100 = sphi 0, %s99
      %s114 = sphi 0, %s100
      %s118 = sphi 0, %s118
      %s120 = sphi 0, %s118
      %s121 = sphi 0, %s120
      %s135 = sphi 0, %s121
      %s139 = sphi 0, %s139
      %s141 = sphi 0, %s139
      %s142 = sphi 0, %s141
      %s156 = sphi 0, %s142
      %s160 = sphi 0, %s160
      %s162 = sphi 0, %s160
      %s163 = sphi 0, %s162
      %s177 = sphi 0, %s163
      %s183 = sphi 0, %s185
      %s186 = sphi 0, %s183
      %s187 = sphi 0, %s186
      %s203 = sphi 0, %s187
    $region4: #{tpu_custom_call.1} parent=1 // loop_header_branch
      %24 = sbr.rel (%p22) target = $region8
    $region5: #{tpu_custom_call.1} parent=1 // loop_body
      %s26 = ssub.s32 %s21, 1
      %s27 = ssub.s32 %s21, 2
      %s28 = sadd.s32 %s21, 1
      %s29 = ssub.s32 %s21, %s28
      %p30 = scmp.eq.s32.totalorder %s29, 0
      %s32 = sadd.s32 %s31, 1
      %s33 = scalar_select %p30, %s31, %s32
      %p36 = pneg %p30
      %p37 = scmp.eq.s32.totalorder %s21, 1
      %p38 = por %p36, %p37
      %p39 = scmp.ne.s32.totalorder %s31, %s34
      %p40 = scmp.eq.s32.totalorder %s21, 0
      %p41 = por %p39, %p40
      %p42 = scmp.ne.s32.totalorder %s31, %s34
      %p43 = scmp.eq.s32.totalorder %s26, 1
      %p44 = por %p42, %p43
      %p45 = scmp.ne.s32.totalorder %s34, %s35
      %p46 = scmp.eq.s32.totalorder %s26, 0
      %p47 = por %p45, %p46
      %p48 = scmp.ne.s32.totalorder %s34, %s35
      %p49 = scmp.eq.s32.totalorder %s27, 1
      %p50 = por %p48, %p49
      %p52 = scmp.ne.s32.totalorder %s35, %s51
      %p53 = scmp.eq.s32.totalorder %s27, 0
      %p54 = por %p52, %p53
      %s56 = sadd.s32 %s55, 1
      %p59 = scmp.eq.s32.totalorder %s21, 1
      %p60 = scmp.ne.s32.totalorder %s55, %s57
      %p61 = scmp.eq.s32.totalorder %s21, 0
      %p62 = por %p60, %p61
      %p63 = scmp.ne.s32.totalorder %s55, %s57
      %p64 = scmp.eq.s32.totalorder %s26, 1
      %p65 = por %p63, %p64
      %p66 = scmp.ne.s32.totalorder %s57, %s58
      %p67 = scmp.eq.s32.totalorder %s26, 0
      %p68 = por %p66, %p67
      %p69 = scmp.ne.s32.totalorder %s57, %s58
      %p70 = scmp.eq.s32.totalorder %s27, 1
      %p71 = por %p69, %p70
      %p73 = scmp.ne.s32.totalorder %s58, %s72
      %p74 = scmp.eq.s32.totalorder %s27, 0
      %p75 = por %p73, %p74
      %s77 = sadd.s32 %s76, 1
      %p80 = scmp.eq.s32.totalorder %s21, 1
      %p81 = scmp.ne.s32.totalorder %s76, %s78
      %p82 = scmp.eq.s32.totalorder %s21, 0
      %p83 = por %p81, %p82
      %p84 = scmp.ne.s32.totalorder %s76, %s78
      %p85 = scmp.eq.s32.totalorder %s26, 1
      %p86 = por %p84, %p85
      %p87 = scmp.ne.s32.totalorder %s78, %s79
      %p88 = scmp.eq.s32.totalorder %s26, 0
      %p89 = por %p87, %p88
      %p90 = scmp.ne.s32.totalorder %s78, %s79
      %p91 = scmp.eq.s32.totalorder %s27, 1
      %p92 = por %p90, %p91
      %p94 = scmp.ne.s32.totalorder %s79, %s93
      %p95 = scmp.eq.s32.totalorder %s27, 0
      %p96 = por %p94, %p95
      %s98 = sadd.s32 %s97, 1
      %p101 = scmp.eq.s32.totalorder %s21, 1
      %p102 = scmp.ne.s32.totalorder %s97, %s99
      %p103 = scmp.eq.s32.totalorder %s21, 0
      %p104 = por %p102, %p103
      %p105 = scmp.ne.s32.totalorder %s97, %s99
      %p106 = scmp.eq.s32.totalorder %s26, 1
      %p107 = por %p105, %p106
      %p108 = scmp.ne.s32.totalorder %s99, %s100
      %p109 = scmp.eq.s32.totalorder %s26, 0
      %p110 = por %p108, %p109
      %p111 = scmp.ne.s32.totalorder %s99, %s100
      %p112 = scmp.eq.s32.totalorder %s27, 1
      %p113 = por %p111, %p112
      %p115 = scmp.ne.s32.totalorder %s100, %s114
      %p116 = scmp.eq.s32.totalorder %s27, 0
      %p117 = por %p115, %p116
      %s119 = sadd.s32 %s118, 1
      %p122 = scmp.eq.s32.totalorder %s21, 1
      %p123 = scmp.ne.s32.totalorder %s118, %s120
      %p124 = scmp.eq.s32.totalorder %s21, 0
      %p125 = por %p123, %p124
      %p126 = scmp.ne.s32.totalorder %s118, %s120
      %p127 = scmp.eq.s32.totalorder %s26, 1
      %p128 = por %p126, %p127
      %p129 = scmp.ne.s32.totalorder %s120, %s121
      %p130 = scmp.eq.s32.totalorder %s26, 0
      %p131 = por %p129, %p130
      %p132 = scmp.ne.s32.totalorder %s120, %s121
      %p133 = scmp.eq.s32.totalorder %s27, 1
      %p134 = por %p132, %p133
      %p136 = scmp.ne.s32.totalorder %s121, %s135
      %p137 = scmp.eq.s32.totalorder %s27, 0
      %p138 = por %p136, %p137
      %s140 = sadd.s32 %s139, 1
      %p143 = scmp.eq.s32.totalorder %s21, 1
      %p144 = scmp.ne.s32.totalorder %s139, %s141
      %p145 = scmp.eq.s32.totalorder %s21, 0
      %p146 = por %p144, %p145
      %p147 = scmp.ne.s32.totalorder %s139, %s141
      %p148 = scmp.eq.s32.totalorder %s26, 1
      %p149 = por %p147, %p148
      %p150 = scmp.ne.s32.totalorder %s141, %s142
      %p151 = scmp.eq.s32.totalorder %s26, 0
      %p152 = por %p150, %p151
      %p153 = scmp.ne.s32.totalorder %s141, %s142
      %p154 = scmp.eq.s32.totalorder %s27, 1
      %p155 = por %p153, %p154
      %p157 = scmp.ne.s32.totalorder %s142, %s156
      %p158 = scmp.eq.s32.totalorder %s27, 0
      %p159 = por %p157, %p158
      %s161 = sadd.s32 %s160, 1
      %p164 = scmp.eq.s32.totalorder %s21, 1
      %p165 = scmp.ne.s32.totalorder %s160, %s162
      %p166 = scmp.eq.s32.totalorder %s21, 0
      %p167 = por %p165, %p166
      %p168 = scmp.ne.s32.totalorder %s160, %s162
      %p169 = scmp.eq.s32.totalorder %s26, 1
      %p170 = por %p168, %p169
      %p171 = scmp.ne.s32.totalorder %s162, %s163
      %p172 = scmp.eq.s32.totalorder %s26, 0
      %p173 = por %p171, %p172
      %p174 = scmp.ne.s32.totalorder %s162, %s163
      %p175 = scmp.eq.s32.totalorder %s27, 1
      %p176 = por %p174, %p175
      %p178 = scmp.ne.s32.totalorder %s163, %s177
      %p179 = scmp.eq.s32.totalorder %s27, 0
      %p180 = por %p178, %p179
      %s181 = ssub.s32 %s21, %s28
      %p182 = scmp.eq.s32.totalorder %s181, 0
      %s184 = sadd.s32 %s183, 1
      %s185 = scalar_select %p182, %s183, %s184
      %p188 = pneg %p182
      %p189 = scmp.eq.s32.totalorder %s21, 1
      %p190 = por %p188, %p189
      %p191 = scmp.ne.s32.totalorder %s183, %s186
      %p192 = scmp.eq.s32.totalorder %s21, 0
      %p193 = por %p191, %p192
      %p194 = scmp.ne.s32.totalorder %s183, %s186
      %p195 = scmp.eq.s32.totalorder %s26, 1
      %p196 = por %p194, %p195
      %p197 = scmp.ne.s32.totalorder %s186, %s187
      %p198 = scmp.eq.s32.totalorder %s26, 0
      %p199 = por %p197, %p198
      %p200 = scmp.ne.s32.totalorder %s186, %s187
      %p201 = scmp.eq.s32.totalorder %s27, 1
      %p202 = por %p200, %p201
      %p204 = scmp.ne.s32.totalorder %s187, %s203
      %p205 = scmp.eq.s32.totalorder %s27, 0
      %p206 = por %p204, %p205
      %p207 = scmp.le.s32.totalorder 1, %s21
      %p208 = scmp.lt.s32.totalorder %s21, 3
      %p209 = pnand %p207, %p208
      %p210 = pneg %p209
      // Predicated region
      $region9: #{tpu_custom_call.1} parent=5 // pred_check
        _
      $region10: #{tpu_custom_call.1} parent=5 // pred_check_branch
        %212 = sbr.rel (%p209) target = $region12
      $region11: #{tpu_custom_call.1} parent=5 // pred_region
        %s213 = ssub.s32 %s21, 1
        // Predicated region
        $region13: #{tpu_custom_call.1} parent=11 // pred_check
          %p214 = pneg %p68
        $region14: #{tpu_custom_call.1} parent=11 // pred_check_branch
          %216 = sbr.rel (%p214) target = $region16
        $region15: #{tpu_custom_call.1} parent=11 // pred_region
          %s218 = ssub.s32 2048, 2048
          %219 = vsyncadd [#allocation6], %s218
          %s220 = sshll.u32 [#allocation5], 4
          %s221 = int_to_ptr.vmem [resolvable:$true] %s220
          %226 = dma.hbm_to_vmem [thread:$0]  %s1, 2048, %s221, [#allocation6], 128, 128, 8
        $region16: #{tpu_custom_call.1} parent=11 // pred_fallthru
          _
        // Predicated region
        $region17: #{tpu_custom_call.1} parent=11 // pred_check
          %p227 = pneg %p89
        $region18: #{tpu_custom_call.1} parent=11 // pred_check_branch
          %229 = sbr.rel (%p227) target = $region20
        $region19: #{tpu_custom_call.1} parent=11 // pred_region
          _
        $region20: #{tpu_custom_call.1} parent=11 // pred_fallthru
          _
        // Predicated region
        $region21: #{tpu_custom_call.1} parent=11 // pred_check
          %p230 = pneg %p110
        $region22: #{tpu_custom_call.1} parent=11 // pred_check_branch
          %232 = sbr.rel (%p230) target = $region24
        $region23: #{tpu_custom_call.1} parent=11 // pred_region
          %s234 = ssub.s32 2048, 2048
          %235 = vsyncadd [#allocation6], %s234
          %s236 = sshll.u32 [#allocation7], 4
          %s237 = int_to_ptr.vmem [resolvable:$true] %s236
          %242 = dma.hbm_to_vmem [thread:$0]  %s3, 2048, %s237, [#allocation6], 128, 128, 8
        $region24: #{tpu_custom_call.1} parent=11 // pred_fallthru
          _
        // Predicated region
        $region25: #{tpu_custom_call.1} parent=11 // pred_check
          %p243 = pneg %p131
        $region26: #{tpu_custom_call.1} parent=11 // pred_check_branch
          %245 = sbr.rel (%p243) target = $region28
        $region27: #{tpu_custom_call.1} parent=11 // pred_region
          _
        $region28: #{tpu_custom_call.1} parent=11 // pred_fallthru
          _
        // Predicated region
        $region29: #{tpu_custom_call.1} parent=11 // pred_check
          %p246 = pneg %p152
        $region30: #{tpu_custom_call.1} parent=11 // pred_check_branch
          %248 = sbr.rel (%p246) target = $region32
        $region31: #{tpu_custom_call.1} parent=11 // pred_region
          %s250 = ssub.s32 2048, 2048
          %251 = vsyncadd [#allocation9], %s250
          %s252 = sshll.u32 [#allocation8], 4
          %s253 = int_to_ptr.vmem [resolvable:$true] %s252
          %258 = dma.hbm_to_vmem [thread:$0]  %s5, 2048, %s253, [#allocation9], 128, 128, 8
        $region32: #{tpu_custom_call.1} parent=11 // pred_fallthru
          _
        // Predicated region
        $region33: #{tpu_custom_call.1} parent=11 // pred_check
          %p259 = pneg %p173
        $region34: #{tpu_custom_call.1} parent=11 // pred_check_branch
          %261 = sbr.rel (%p259) target = $region36
        $region35: #{tpu_custom_call.1} parent=11 // pred_region
          _
        $region36: #{tpu_custom_call.1} parent=11 // pred_fallthru
          _
      $region12: #{tpu_custom_call.1} parent=5 // pred_fallthru
        _
      %p262 = scmp.lt.s32.totalorder %s21, 2
      // Predicated region
      $region37: #{tpu_custom_call.1} parent=5 // pred_check
        %p263 = pneg %p262
      $region38: #{tpu_custom_call.1} parent=5 // pred_check_branch
        %265 = sbr.rel (%p263) target = $region40
      $region39: #{tpu_custom_call.1} parent=5 // pred_region
        // Predicated region
        $region41: #{tpu_custom_call.1} parent=39 // pred_check
          %p266 = pneg %p41
        $region42: #{tpu_custom_call.1} parent=39 // pred_check_branch
          %268 = sbr.rel (%p266) target = $region44
        $region43: #{tpu_custom_call.1} parent=39 // pred_region
          %s269 = sand.u32 %s31, 1
          %s270 = scalar_lea.sflag [#allocation3], %s269
          %s271 = sand.u32 %s31, 1
          %s272 = smul.addr %s271, 8
          %s273 = scalar_lea.vmem [#allocation2], %s272
          %s275 = ssub.s32 128, 128
          %276 = vsyncadd %s270, %s275
          %s277 = smul.addr %s21, 128
          %s278 = scalar_lea.hbm %s0, %s277
          %s280 = sshll.u32 %s273, 4
          %s281 = int_to_ptr.vmem [resolvable:$true] %s280
          %283 = dma.hbm_to_vmem [thread:$0]  %s278, 128, %s281, %s270
        $region44: #{tpu_custom_call.1} parent=39 // pred_fallthru
          _
      $region40: #{tpu_custom_call.1} parent=5 // pred_fallthru
        _
      %p284 = scmp.le.s32.totalorder 1, %s21
      %p285 = scmp.lt.s32.totalorder %s21, 3
      %p286 = pnand %p284, %p285
      %p287 = pneg %p286
      // Predicated region
      $region45: #{tpu_custom_call.1} parent=5 // pred_check
        _
      $region46: #{tpu_custom_call.1} parent=5 // pred_check_branch
        %289 = sbr.rel (%p286) target = $region48
      $region47: #{tpu_custom_call.1} parent=5 // pred_region
        %s290 = ssub.s32 %s21, 1
        %s291 = sand.u32 %s34, 1
        %s292 = scalar_lea.sflag [#allocation3], %s291
        %s293 = sand.u32 %s34, 1
        %s294 = smul.addr %s293, 8
        %s295 = scalar_lea.vmem [#allocation2], %s294
        // Predicated region
        $region49: #{tpu_custom_call.1} parent=47 // pred_check
          %p296 = pneg %p47
        $region50: #{tpu_custom_call.1} parent=47 // pred_check_branch
          %298 = sbr.rel (%p296) target = $region52
        $region51: #{tpu_custom_call.1} parent=47 // pred_region
          %299 = dma.done %s292, 128
        $region52: #{tpu_custom_call.1} parent=47 // pred_fallthru
          _
        // Predicated region
        $region53: #{tpu_custom_call.1} parent=47 // pred_check
          %p300 = pneg %p68
        $region54: #{tpu_custom_call.1} parent=47 // pred_check_branch
          %302 = sbr.rel (%p300) target = $region56
        $region55: #{tpu_custom_call.1} parent=47 // pred_region
          %303 = dma.done [#allocation6], 2048
        $region56: #{tpu_custom_call.1} parent=47 // pred_fallthru
          _
        // Predicated region
        $region57: #{tpu_custom_call.1} parent=47 // pred_check
          %p304 = pneg %p110
        $region58: #{tpu_custom_call.1} parent=47 // pred_check_branch
          %306 = sbr.rel (%p304) target = $region60
        $region59: #{tpu_custom_call.1} parent=47 // pred_region
          %307 = dma.done [#allocation6], 2048
        $region60: #{tpu_custom_call.1} parent=47 // pred_fallthru
          _
        // Predicated region
        $region61: #{tpu_custom_call.1} parent=47 // pred_check
          %p308 = pneg %p152
        $region62: #{tpu_custom_call.1} parent=47 // pred_check_branch
          %310 = sbr.rel (%p308) target = $region64
        $region63: #{tpu_custom_call.1} parent=47 // pred_region
          %311 = dma.done [#allocation9], 2048
        $region64: #{tpu_custom_call.1} parent=47 // pred_fallthru
          _
        %s312 = sand.u32 %s34, 1
        %s313 = scalar_lea.sflag [#allocation3], %s312
        %s314 = sand.u32 %s34, 1
        %s315 = smul.addr %s314, 8
        %s316 = scalar_lea.vmem [#allocation2], %s315
        %p317 = pneg %p47
        %p318 = pneg %p44
        %p319 = pneg %p68
        %p320 = pneg %p65
        %p321 = pneg %p89
        %p322 = pneg %p86
        %p323 = pneg %p110
        %p324 = pneg %p107
        %p325 = pneg %p131
        %p326 = pneg %p128
        %p327 = pneg %p152
        %p328 = pneg %p149
        %p329 = pneg %p173
        %p330 = pneg %p170
        %p331 = pneg %p199
        %p332 = pneg %p196
        %s333 = sand.u32 %s186, 1
        %s334 = scalar_lea.sflag [#allocation4], %s333
        %s335 = sand.u32 %s186, 1
        %s336 = smul.addr %s335, 8
        %s337 = scalar_lea.vmem [#allocation10], %s336
        %v338 = vld [vmem:[%s295] sm:$0xff]
        %v339 = vmul.f32 %v338, %v338
        %340 = vadd.xlane.f32.xlu0 %v339
        %v341 = vpop.xlane.xlu0 %340
        %v342 = vmul.f32 %v341, 0.03125
        %v343 = vadd.f32 %v342, 1e-08
        %v344 = vrsqrt.pop %v343
        %v345 = vmul.f32 %v338, %v344
        %v346 = vld [vmem:[#allocation5] sm:$0xff]
        %v347 = vld [vmem:[#allocation5 + $0x8] sm:$0xff]
        %v348 = vld [vmem:[#allocation5 + $0x10] sm:$0xff]
        %v349 = vld [vmem:[#allocation5 + $0x18] sm:$0xff]
        %v350 = vld [vmem:[#allocation5 + $0x20] sm:$0xff]
        %v351 = vld [vmem:[#allocation5 + $0x28] sm:$0xff]
        %v352 = vld [vmem:[#allocation5 + $0x30] sm:$0xff]
        %v353 = vld [vmem:[#allocation5 + $0x38] sm:$0xff]
        %v354 = vld [vmem:[#allocation5 + $0x40] sm:$0xff]
        %v355 = vld [vmem:[#allocation5 + $0x48] sm:$0xff]
        %v356 = vld [vmem:[#allocation5 + $0x50] sm:$0xff]
        %v357 = vld [vmem:[#allocation5 + $0x58] sm:$0xff]
        %v358 = vld [vmem:[#allocation5 + $0x60] sm:$0xff]
        %v359 = vld [vmem:[#allocation5 + $0x68] sm:$0xff]
        %v360 = vld [vmem:[#allocation5 + $0x70] sm:$0xff]
        %v361 = vld [vmem:[#allocation5 + $0x78] sm:$0xff]
        %v362 = vld [vmem:[%s2] sm:$0x1]
        %v364 = vlaneseq
        %v365 = vshrl.u32 %v364, 7
        %v366 = vsub.s32 0, %v365
        %v367 = vrot.slane %v362, %v366
        %369 = vmatprep.subr.mxu0 0.0
        %370 = vmatpush1.msra.mxu0 %v346
        %371 = vmatprep.subr.mxu0 0.0
        %372 = vmatpush1.msra.mxu0 %v347
        %373 = vmatprep.subr.mxu0 0.0
        %374 = vmatpush1.msra.mxu0 %v348
        %375 = vmatprep.subr.mxu0 0.0
        %376 = vmatpush1.msra.mxu0 %v349
        %377 = vmatprep.subr.mxu0 0.0
        %378 = vmatpush1.msra.mxu0 %v350
        %379 = vmatprep.subr.mxu0 0.0
        %380 = vmatpush1.msra.mxu0 %v351
        %381 = vmatprep.subr.mxu0 0.0
        %382 = vmatpush1.msra.mxu0 %v352
        %383 = vmatprep.subr.mxu0 0.0
        %384 = vmatpush1.msra.mxu0 %v353
        %385 = vmatprep.subr.mxu0 0.0
        %386 = vmatpush1.msra.mxu0 %v354
        %387 = vmatprep.subr.mxu0 0.0
        %388 = vmatpush1.msra.mxu0 %v355
        %389 = vmatprep.subr.mxu0 0.0
        %390 = vmatpush1.msra.mxu0 %v356
        %391 = vmatprep.subr.mxu0 0.0
        %392 = vmatpush1.msra.mxu0 %v357
        %393 = vmatprep.subr.mxu0 0.0
        %394 = vmatpush1.msra.mxu0 %v358
        %395 = vmatprep.subr.mxu0 0.0
        %396 = vmatpush1.msra.mxu0 %v359
        %397 = vmatprep.subr.mxu0 0.0
        %398 = vmatpush1.msra.mxu0 %v360
        %399 = vmatprep.subr.mxu0 0.0
        %400 = vmatpush1.msra.mxu0 %v361
        %401 = vmatprep.subr.mxu0 0.0
        %402 = vmatpush1.msra.mxu0 0.0
        %403 = vmatprep.subr.mxu0 0.0
        %404 = vmatpush1.msra.mxu0 0.0
        %405 = vmatprep.subr.mxu0 0.0
        %406 = vmatpush1.msra.mxu0 0.0
        %407 = vmatprep.subr.mxu0 0.0
        %408 = vmatpush1.msra.mxu0 0.0
        %409 = vmatprep.subr.mxu0 0.0
        %410 = vmatpush1.msra.mxu0 0.0
        %411 = vmatprep.subr.mxu0 0.0
        %412 = vmatpush1.msra.mxu0 0.0
        %413 = vmatprep.subr.mxu0 0.0
        %414 = vmatpush1.msra.mxu0 0.0
        %415 = vmatprep.subr.mxu0 0.0
        %416 = vmatpush1.msra.mxu0 0.0
        %417 = vmatprep.subr.mxu0 0.0
        %418 = vmatpush1.msra.mxu0 0.0
        %419 = vmatprep.subr.mxu0 0.0
        %420 = vmatpush1.msra.mxu0 0.0
        %421 = vmatprep.subr.mxu0 0.0
        %422 = vmatpush1.msra.mxu0 0.0
        %423 = vmatprep.subr.mxu0 0.0
        %424 = vmatpush1.msra.mxu0 0.0
        %425 = vmatprep.subr.mxu0 0.0
        %426 = vmatpush1.msra.mxu0 0.0
        %427 = vmatprep.subr.mxu0 0.0
        %428 = vmatpush1.msra.mxu0 0.0
        %429 = vmatprep.subr.mxu0 0.0
        %430 = vmatpush1.msra.mxu0 0.0
        %431 = vmatprep.subr.mxu0 0.0
        %432 = vmatpush1.msra.mxu0 0.0
        %433 = vmatprep.mubr.f32.mxu0 0.0
        %434 = vmatmul.mubr.f32.gmra.mrb[0].mxu0 %v345
        %v435 = vpop.f32.mrb[0].mxu0
        %v436 = vadd.f32 %v367, %v435
        %v437 = vpop.f32.mrb[0].mxu0
        %438 = vdwg.mxu0
        %vm439 = vcmp.gt.f32.partialorder %v436, 0.0
        %v440 = vmul.f32 %v436, 0.2
        %v441 = vsel %vm439, %v436, %v440
        %v442 = vld [vmem:[#allocation7] sm:$0xff]
        %v443 = vld [vmem:[#allocation7 + $0x8] sm:$0xff]
        %v444 = vld [vmem:[#allocation7 + $0x10] sm:$0xff]
        %v445 = vld [vmem:[#allocation7 + $0x18] sm:$0xff]
        %v446 = vld [vmem:[#allocation7 + $0x20] sm:$0xff]
        %v447 = vld [vmem:[#allocation7 + $0x28] sm:$0xff]
        %v448 = vld [vmem:[#allocation7 + $0x30] sm:$0xff]
        %v449 = vld [vmem:[#allocation7 + $0x38] sm:$0xff]
        %v450 = vld [vmem:[#allocation7 + $0x40] sm:$0xff]
        %v451 = vld [vmem:[#allocation7 + $0x48] sm:$0xff]
        %v452 = vld [vmem:[#allocation7 + $0x50] sm:$0xff]
        %v453 = vld [vmem:[#allocation7 + $0x58] sm:$0xff]
        %v454 = vld [vmem:[#allocation7 + $0x60] sm:$0xff]
        %v455 = vld [vmem:[#allocation7 + $0x68] sm:$0xff]
        %v456 = vld [vmem:[#allocation7 + $0x70] sm:$0xff]
        %v457 = vld [vmem:[#allocation7 + $0x78] sm:$0xff]
        %v458 = vld [vmem:[%s4] sm:$0x1]
        %v460 = vlaneseq
        %v461 = vshrl.u32 %v460, 7
        %v462 = vsub.s32 0, %v461
        %v463 = vrot.slane %v458, %v462
        %465 = vmatprep.subr.mxu0 0.0
        %466 = vmatpush1.msra.mxu0 %v442
        %467 = vmatprep.subr.mxu0 0.0
        %468 = vmatpush1.msra.mxu0 %v443
        %469 = vmatprep.subr.mxu0 0.0
        %470 = vmatpush1.msra.mxu0 %v444
        %471 = vmatprep.subr.mxu0 0.0
        %472 = vmatpush1.msra.mxu0 %v445
        %473 = vmatprep.subr.mxu0 0.0
        %474 = vmatpush1.msra.mxu0 %v446
        %475 = vmatprep.subr.mxu0 0.0
        %476 = vmatpush1.msra.mxu0 %v447
        %477 = vmatprep.subr.mxu0 0.0
        %478 = vmatpush1.msra.mxu0 %v448
        %479 = vmatprep.subr.mxu0 0.0
        %480 = vmatpush1.msra.mxu0 %v449
        %481 = vmatprep.subr.mxu0 0.0
        %482 = vmatpush1.msra.mxu0 %v450
        %483 = vmatprep.subr.mxu0 0.0
        %484 = vmatpush1.msra.mxu0 %v451
        %485 = vmatprep.subr.mxu0 0.0
        %486 = vmatpush1.msra.mxu0 %v452
        %487 = vmatprep.subr.mxu0 0.0
        %488 = vmatpush1.msra.mxu0 %v453
        %489 = vmatprep.subr.mxu0 0.0
        %490 = vmatpush1.msra.mxu0 %v454
        %491 = vmatprep.subr.mxu0 0.0
        %492 = vmatpush1.msra.mxu0 %v455
        %493 = vmatprep.subr.mxu0 0.0
        %494 = vmatpush1.msra.mxu0 %v456
        %495 = vmatprep.subr.mxu0 0.0
        %496 = vmatpush1.msra.mxu0 %v457
        %497 = vmatprep.subr.mxu0 0.0
        %498 = vmatpush1.msra.mxu0 0.0
        %499 = vmatprep.subr.mxu0 0.0
        %500 = vmatpush1.msra.mxu0 0.0
        %501 = vmatprep.subr.mxu0 0.0
        %502 = vmatpush1.msra.mxu0 0.0
        %503 = vmatprep.subr.mxu0 0.0
        %504 = vmatpush1.msra.mxu0 0.0
        %505 = vmatprep.subr.mxu0 0.0
        %506 = vmatpush1.msra.mxu0 0.0
        %507 = vmatprep.subr.mxu0 0.0
        %508 = vmatpush1.msra.mxu0 0.0
        %509 = vmatprep.subr.mxu0 0.0
        %510 = vmatpush1.msra.mxu0 0.0
        %511 = vmatprep.subr.mxu0 0.0
        %512 = vmatpush1.msra.mxu0 0.0
        %513 = vmatprep.subr.mxu0 0.0
        %514 = vmatpush1.msra.mxu0 0.0
        %515 = vmatprep.subr.mxu0 0.0
        %516 = vmatpush1.msra.mxu0 0.0
        %517 = vmatprep.subr.mxu0 0.0
        %518 = vmatpush1.msra.mxu0 0.0
        %519 = vmatprep.subr.mxu0 0.0
        %520 = vmatpush1.msra.mxu0 0.0
        %521 = vmatprep.subr.mxu0 0.0
        %522 = vmatpush1.msra.mxu0 0.0
        %523 = vmatprep.subr.mxu0 0.0
        %524 = vmatpush1.msra.mxu0 0.0
        %525 = vmatprep.subr.mxu0 0.0
        %526 = vmatpush1.msra.mxu0 0.0
        %527 = vmatprep.subr.mxu0 0.0
        %528 = vmatpush1.msra.mxu0 0.0
        %529 = vmatprep.mubr.f32.mxu0 0.0
        %530 = vmatmul.mubr.f32.gmra.mrb[0].mxu0 %v441
        %v531 = vpop.f32.mrb[0].mxu0
        %v532 = vadd.f32 %v463, %v531
        %v533 = vpop.f32.mrb[0].mxu0
        %534 = vdwg.mxu0
        %vm535 = vcmp.gt.f32.partialorder %v532, 0.0
        %v536 = vmul.f32 %v532, 0.2
        %v537 = vsel %vm535, %v532, %v536
        %v538 = vld [vmem:[#allocation8] sm:$0xff]
        %v539 = vld [vmem:[#allocation8 + $0x8] sm:$0xff]
        %v540 = vld [vmem:[#allocation8 + $0x10] sm:$0xff]
        %v541 = vld [vmem:[#allocation8 + $0x18] sm:$0xff]
        %v542 = vld [vmem:[#allocation8 + $0x20] sm:$0xff]
        %v543 = vld [vmem:[#allocation8 + $0x28] sm:$0xff]
        %v544 = vld [vmem:[#allocation8 + $0x30] sm:$0xff]
        %v545 = vld [vmem:[#allocation8 + $0x38] sm:$0xff]
        %v546 = vld [vmem:[#allocation8 + $0x40] sm:$0xff]
        %v547 = vld [vmem:[#allocation8 + $0x48] sm:$0xff]
        %v548 = vld [vmem:[#allocation8 + $0x50] sm:$0xff]
        %v549 = vld [vmem:[#allocation8 + $0x58] sm:$0xff]
        %v550 = vld [vmem:[#allocation8 + $0x60] sm:$0xff]
        %v551 = vld [vmem:[#allocation8 + $0x68] sm:$0xff]
        %v552 = vld [vmem:[#allocation8 + $0x70] sm:$0xff]
        %v553 = vld [vmem:[#allocation8 + $0x78] sm:$0xff]
        %v554 = vld [vmem:[%s6] sm:$0x1]
        %v556 = vlaneseq
        %v557 = vshrl.u32 %v556, 7
        %v558 = vsub.s32 0, %v557
        %v559 = vrot.slane %v554, %v558
        %561 = vmatprep.subr.mxu0 0.0
        %562 = vmatpush1.msra.mxu0 %v538
        %563 = vmatprep.subr.mxu0 0.0
        %564 = vmatpush1.msra.mxu0 %v539
        %565 = vmatprep.subr.mxu0 0.0
        %566 = vmatpush1.msra.mxu0 %v540
        %567 = vmatprep.subr.mxu0 0.0
        %568 = vmatpush1.msra.mxu0 %v541
        %569 = vmatprep.subr.mxu0 0.0
        %570 = vmatpush1.msra.mxu0 %v542
        %571 = vmatprep.subr.mxu0 0.0
        %572 = vmatpush1.msra.mxu0 %v543
        %573 = vmatprep.subr.mxu0 0.0
        %574 = vmatpush1.msra.mxu0 %v544
        %575 = vmatprep.subr.mxu0 0.0
        %576 = vmatpush1.msra.mxu0 %v545
        %577 = vmatprep.subr.mxu0 0.0
        %578 = vmatpush1.msra.mxu0 %v546
        %579 = vmatprep.subr.mxu0 0.0
        %580 = vmatpush1.msra.mxu0 %v547
        %581 = vmatprep.subr.mxu0 0.0
        %582 = vmatpush1.msra.mxu0 %v548
        %583 = vmatprep.subr.mxu0 0.0
        %584 = vmatpush1.msra.mxu0 %v549
        %585 = vmatprep.subr.mxu0 0.0
        %586 = vmatpush1.msra.mxu0 %v550
        %587 = vmatprep.subr.mxu0 0.0
        %588 = vmatpush1.msra.mxu0 %v551
        %589 = vmatprep.subr.mxu0 0.0
        %590 = vmatpush1.msra.mxu0 %v552
        %591 = vmatprep.subr.mxu0 0.0
        %592 = vmatpush1.msra.mxu0 %v553
        %593 = vmatprep.subr.mxu0 0.0
        %594 = vmatpush1.msra.mxu0 0.0
        %595 = vmatprep.subr.mxu0 0.0
        %596 = vmatpush1.msra.mxu0 0.0
        %597 = vmatprep.subr.mxu0 0.0
        %598 = vmatpush1.msra.mxu0 0.0
        %599 = vmatprep.subr.mxu0 0.0
        %600 = vmatpush1.msra.mxu0 0.0
        %601 = vmatprep.subr.mxu0 0.0
        %602 = vmatpush1.msra.mxu0 0.0
        %603 = vmatprep.subr.mxu0 0.0
        %604 = vmatpush1.msra.mxu0 0.0
        %605 = vmatprep.subr.mxu0 0.0
        %606 = vmatpush1.msra.mxu0 0.0
        %607 = vmatprep.subr.mxu0 0.0
        %608 = vmatpush1.msra.mxu0 0.0
        %609 = vmatprep.subr.mxu0 0.0
        %610 = vmatpush1.msra.mxu0 0.0
        %611 = vmatprep.subr.mxu0 0.0
        %612 = vmatpush1.msra.mxu0 0.0
        %613 = vmatprep.subr.mxu0 0.0
        %614 = vmatpush1.msra.mxu0 0.0
        %615 = vmatprep.subr.mxu0 0.0
        %616 = vmatpush1.msra.mxu0 0.0
        %617 = vmatprep.subr.mxu0 0.0
        %618 = vmatpush1.msra.mxu0 0.0
        %619 = vmatprep.subr.mxu0 0.0
        %620 = vmatpush1.msra.mxu0 0.0
        %621 = vmatprep.subr.mxu0 0.0
        %622 = vmatpush1.msra.mxu0 0.0
        %623 = vmatprep.subr.mxu0 0.0
        %624 = vmatpush1.msra.mxu0 0.0
        %625 = vmatprep.mubr.f32.mxu0 0.0
        %626 = vmatmul.mubr.f32.gmra.mrb[0].mxu0 %v537
        %v627 = vpop.f32.mrb[0].mxu0
        %v628 = vadd.f32 %v559, %v627
        %v629 = vpop.f32.mrb[0].mxu0
        %630 = vdwg.mxu0
        %vm631 = vcmp.gt.f32.partialorder %v628, 0.0
        %v632 = vmul.f32 %v628, 0.2
        %v633 = vsel %vm631, %v628, %v632
        %634 = vst [vmem:[%s337] sm:$0xff] %v633
        %s635 = sand.u32 %s186, 1
        %s636 = scalar_lea.sflag [#allocation4], %s635
        %s637 = sand.u32 %s186, 1
        %s638 = smul.addr %s637, 8
        %s639 = scalar_lea.vmem [#allocation10], %s638
        // Predicated region
        $region65: #{tpu_custom_call.1} parent=47 // pred_check
          %p640 = pneg %p196
        $region66: #{tpu_custom_call.1} parent=47 // pred_check_branch
          %642 = sbr.rel (%p640) target = $region68
        $region67: #{tpu_custom_call.1} parent=47 // pred_region
          %s644 = ssub.s32 128, 128
          %645 = vsyncadd %s636, %s644
          %s646 = smul.addr %s26, 128
          %s647 = scalar_lea.hbm %s7, %s646
          %s649 = sshll.u32 %s639, 4
          %s650 = int_to_ptr.vmem [resolvable:$true] %s649
          %652 = dma.vmem_to_hbm [thread:$0]  %s650, 128, %s647, %s636
        $region68: #{tpu_custom_call.1} parent=47 // pred_fallthru
          _
      $region48: #{tpu_custom_call.1} parent=5 // pred_fallthru
        _
      %p653 = scmp.le.s32.totalorder 2, %s21
      // Predicated region
      $region69: #{tpu_custom_call.1} parent=5 // pred_check
        %p654 = pneg %p653
      $region70: #{tpu_custom_call.1} parent=5 // pred_check_branch
        %656 = sbr.rel (%p654) target = $region72
      $region71: #{tpu_custom_call.1} parent=5 // pred_region
        %s657 = ssub.s32 %s21, 2
        // Predicated region
        $region73: #{tpu_custom_call.1} parent=71 // pred_check
          %p658 = pneg %p202
        $region74: #{tpu_custom_call.1} parent=71 // pred_check_branch
          %660 = sbr.rel (%p658) target = $region76
        $region75: #{tpu_custom_call.1} parent=71 // pred_region
          %s661 = sand.u32 %s187, 1
          %s662 = scalar_lea.sflag [#allocation4], %s661
          %s663 = sand.u32 %s187, 1
          %s664 = smul.addr %s663, 8
          %s665 = scalar_lea.vmem [#allocation10], %s664
          %666 = dma.done %s662, 128
        $region76: #{tpu_custom_call.1} parent=71 // pred_fallthru
          _
      $region72: #{tpu_custom_call.1} parent=5 // pred_fallthru
        _
    $region6: #{tpu_custom_call.1} parent=1 // loop_footer
      %s25 = sadd.s32 1, %s21
    $region7: #{tpu_custom_call.1} parent=1 // loop_footer_branch
      %20 = sbr.rel target = $region3
    $region8: #{tpu_custom_call.1} parent=1 // loop_exit
      _
    %667 = vsyncpa [#allocation3], 1
    %s668 = scalar_lea.sflag [#allocation3], 1
    %669 = vsyncpa %s668, 1
    %670 = vsyncpa [#allocation6], 1
    %671 = vsyncpa [#allocation9], 1
    %672 = vsyncpa [#allocation4], 1
    %s673 = scalar_lea.sflag [#allocation4], 1
    %674 = vsyncpa %s673, 1

</llo_original>
